<compile_context>
chip_gen: v5e
topology: v5e:2x2
jax: 0.10.0
libtpu: 0.0.40
codegen_flags: <defaults>
</compile_context>

<pallas_src>
import functools
import math

import jax
import jax.numpy as jnp
from jax.experimental import pallas as pl
from jax.experimental.pallas import tpu as pltpu


def _round_up(x, m):
    return (x + m - 1) // m * m


def sage1_kernel(a_ref, invdeg_ref, xk_ref, xself_ref, wl_ref, wr_ref, b_ref,
                 h_ref, acc_ref):
    """SAGEConv layer 1 (+ReLU) for one (row-tile, source-tile) grid step.

    a_ref:      (TM, TK) bf16  unnormalized 0/1 adjacency block
    invdeg_ref: (TM, 1)  f32   1/deg of this row tile (mean aggregation)
    xk_ref:     (TK, Fp) bf16  source-node features for this K tile
    xself_ref:  (TM, Fp) bf16  root (self) features for this row tile
    acc_ref:    (TM, Fp) f32   VMEM accumulator for sum_j A[i, j] * x_j
    """
    k = pl.program_id(1)

    @pl.when(k == 0)
    def _():
        acc_ref[...] = jnp.zeros_like(acc_ref)

    # dominant matmul: bf16 x bf16 on the MXU, f32 accumulate
    acc_ref[...] += jnp.dot(a_ref[...], xk_ref[...],
                            preferred_element_type=jnp.float32)

    @pl.when(k == pl.num_programs(1) - 1)
    def _():
        agg = acc_ref[...] * invdeg_ref[...]          # exact f32 mean scaling
        x_self = xself_ref[...].astype(jnp.float32)
        h = (jnp.dot(agg, wl_ref[...], preferred_element_type=jnp.float32)
             + jnp.dot(x_self, wr_ref[...], preferred_element_type=jnp.float32)
             + b_ref[...])
        # TODO(synk): F.dropout(x, training=self.training) is stochastic; this
        # is the inference-mode identity path.
        h_ref[...] = jnp.maximum(h, 0.0).astype(h_ref.dtype)


def sage2_kernel(a_ref, invdeg_ref, hk_ref, hself_ref, wl_ref, wr_ref, b_ref,
                 probs_ref, logits_ref, acc_ref, *, num_classes):
    """SAGEConv layer 2 + softmax(dim=1) for one (row-tile, source-tile) step."""
    k = pl.program_id(1)

    @pl.when(k == 0)
    def _():
        acc_ref[...] = jnp.zeros_like(acc_ref)

    acc_ref[...] += jnp.dot(a_ref[...], hk_ref[...],
                            preferred_element_type=jnp.float32)

    @pl.when(k == pl.num_programs(1) - 1)
    def _():
        agg = acc_ref[...] * invdeg_ref[...]
        h_self = hself_ref[...].astype(jnp.float32)
        logits = (jnp.dot(agg, wl_ref[...], preferred_element_type=jnp.float32)
                  + jnp.dot(h_self, wr_ref[...],
                            preferred_element_type=jnp.float32)
                  + b_ref[...])
        logits_ref[...] = logits

        # softmax over the true class lanes only (class dim padded to 128).
        # Exact divide so rows sum to 1 in f32 (the approx reciprocal was the
        # source of the previous correctness failure).
        tm, cp = probs_ref.shape
        col = jax.lax.broadcasted_iota(jnp.int32, (tm, cp), 1)
        valid = col < num_classes
        masked = jnp.where(valid, logits, jnp.float32(-1e30))
        m = jnp.max(masked, axis=1, keepdims=True)
        e = jnp.where(valid, jnp.exp(masked - m), 0.0)
        denom = jnp.sum(e, axis=1, keepdims=True)
        probs_ref[...] = e / denom


def make_params(key, num_features, hidden_channels, num_classes):
    """Deterministic SAGEConv params. Weights are (in, out); biases (1, out)."""
    ks = jax.random.split(key, 6)

    def lin(k, fan_in, fan_out):
        bound = 1.0 / jnp.sqrt(jnp.float32(fan_in))
        return jax.random.uniform(k, (fan_in, fan_out), jnp.float32,
                                  -bound, bound)

    wl1 = lin(ks[0], num_features, hidden_channels)
    wr1 = lin(ks[1], num_features, hidden_channels)
    b1 = jax.random.uniform(ks[2], (1, hidden_channels), jnp.float32,
                            -1.0 / jnp.sqrt(num_features),
                            1.0 / jnp.sqrt(num_features))
    wl2 = lin(ks[3], hidden_channels, num_classes)
    wr2 = lin(ks[4], hidden_channels, num_classes)
    b2 = jax.random.uniform(ks[5], (1, num_classes), jnp.float32,
                            -1.0 / jnp.sqrt(hidden_channels),
                            1.0 / jnp.sqrt(hidden_channels))
    return wl1, wr1, b1, wl2, wr2, b2


@functools.partial(jax.jit,
                   static_argnames=("num_nodes", "num_classes",
                                    "tile_m", "tile_k"))
def gnn_forward(x, edge_index, params, *, num_nodes, num_classes,
                tile_m=256, tile_k=256):
    # tile_m=256 matches the 256-wide MXU on v6e/v7x; prefer tile_m=128 on v5e.
    wl1, wr1, b1, wl2, wr2, b2 = params
    n = num_nodes
    f = wl1.shape[0]
    hid = wl1.shape[1]
    c = num_classes

    # padded sizes: nodes -> multiple of both tiles, channels -> lane-dense 128
    np_ = _round_up(n, math.lcm(tile_m, tile_k))
    fp = _round_up(f, 128)
    hp = _round_up(hid, 128)
    cp = _round_up(c, 128)

    src, dst = edge_index[0], edge_index[1]
    # Dense, UNNORMALIZED adjacency built directly in bf16 (edge counts <= 256
    # are exact); degree / 1/deg kept separately in f32 (exact mean scaling).
    ones_bf16 = jnp.ones(src.shape, jnp.bfloat16)
    adj = jnp.zeros((np_, np_), jnp.bfloat16).at[dst, src].add(ones_bf16)
    deg = jnp.zeros((np_,), jnp.float32).at[dst].add(1.0)
    inv_deg = (1.0 / jnp.maximum(deg, 1.0)).reshape(np_, 1)
    # TODO(synk): for realistically sparse graphs, replace the dense O(N^2)
    # adjacency stream with CSR row pointers via scalar prefetch / block-skip.

    x_bf16 = jnp.pad(x.astype(jnp.float32),
                     ((0, np_ - n), (0, fp - f))).astype(jnp.bfloat16)
    wl1p = jnp.pad(wl1, ((0, fp - f), (0, hp - hid)))
    wr1p = jnp.pad(wr1, ((0, fp - f), (0, hp - hid)))
    b1p = jnp.pad(b1, ((0, 0), (0, hp - hid)))
    wl2p = jnp.pad(wl2, ((0, hp - hid), (0, cp - c)))
    wr2p = jnp.pad(wr2, ((0, hp - hid), (0, cp - c)))
    b2p = jnp.pad(b2, ((0, 0), (0, cp - c)))

    grid = (np_ // tile_m, np_ // tile_k)

    def a_spec():
        return pl.BlockSpec((tile_m, tile_k), lambda i, k: (i, k))

    def row_tile(cols):
        return pl.BlockSpec((tile_m, cols), lambda i, k: (i, 0))

    def k_tile(cols):
        return pl.BlockSpec((tile_k, cols), lambda i, k: (k, 0))

    def full(shape):
        return pl.BlockSpec(shape, lambda i, k: (0, 0))

    cparams = pltpu.CompilerParams(
        dimension_semantics=("parallel", "arbitrary"))

    # ---- layer 1: SAGEConv + ReLU -> H (bf16, lane-dense) ----
    h = pl.pallas_call(
        sage1_kernel,
        grid=grid,
        in_specs=[a_spec(),            # A block      (TM, TK) bf16
                  row_tile(1),         # 1/deg        (TM, 1)  f32
                  k_tile(fp),          # X source     (TK, Fp) bf16
                  row_tile(fp),        # X self       (TM, Fp) bf16
                  full((fp, hp)), full((fp, hp)), full((1, hp))],
        out_specs=row_tile(hp),
        out_shape=jax.ShapeDtypeStruct((np_, hp), jnp.bfloat16),
        scratch_shapes=[pltpu.VMEM((tile_m, fp), jnp.float32)],
        compiler_params=cparams,
    )(adj, inv_deg, x_bf16, x_bf16, wl1p, wr1p, b1p)

    # ---- layer 2: SAGEConv + softmax -> (probs, logits) ----
    probs_p, logits_p = pl.pallas_call(
        functools.partial(sage2_kernel, num_classes=c),
        grid=grid,
        in_specs=[a_spec(),
                  row_tile(1),
                  k_tile(hp),          # H source     (TK, Hp) bf16
                  row_tile(hp),        # H self       (TM, Hp) bf16
                  full((hp, cp)), full((hp, cp)), full((1, cp))],
        out_specs=(row_tile(cp), row_tile(cp)),
        out_shape=(jax.ShapeDtypeStruct((np_, cp), jnp.float32),
                   jax.ShapeDtypeStruct((np_, cp), jnp.float32)),
        scratch_shapes=[pltpu.VMEM((tile_m, hp), jnp.float32)],
        compiler_params=cparams,
    )(adj, inv_deg, h, h, wl2p, wr2p, b2p)

    return probs_p[:n, :c], logits_p[:n, :c]


def gnn_reference(x, edge_index, params, num_nodes):
    """Pure-JAX f32 reference with PyG SAGEConv 'mean' semantics."""
    src, dst = edge_index[0], edge_index[1]
    adj = jnp.zeros((num_nodes, num_nodes), jnp.float32).at[dst, src].add(1.0)
    deg = jnp.sum(adj, axis=1, keepdims=True)
    adj = adj / jnp.maximum(deg, 1.0)
    wl1, wr1, b1, wl2, wr2, b2 = params
    xf = x.astype(jnp.float32)
    h = jnp.maximum((adj @ xf) @ wl1 + xf @ wr1 + b1, 0.0)
    logits = (adj @ h) @ wl2 + h @ wr2 + b2
    probs = jax.nn.softmax(logits, axis=1)
    return probs, logits


if __name__ == "__main__":
    num_nodes = 200          # not a multiple of the tile -> exercises padding
    num_features = 16
    hidden_channels = 32
    num_classes = 4
    num_edges = 800

    key = jax.random.PRNGKey(0)
    k_x, k_src, k_dst, k_param = jax.random.split(key, 4)

    x = jax.random.normal(k_x, (num_nodes, num_features), jnp.float32)
    edge_index = jnp.stack([
        jax.random.randint(k_src, (num_edges,), 0, num_nodes, jnp.int32),
        jax.random.randint(k_dst, (num_edges,), 0, num_nodes, jnp.int32),
    ], axis=0)  # [2, E]

    params = make_params(k_param, num_features, hidden_channels, num_classes)

    # small tiles here so the (row, K) grid is actually exercised at toy size;
    # production default is tile_m = tile_k = 256 (v6e/v7x).
    probs, logits = gnn_forward(x, edge_index, params,
                                num_nodes=num_nodes, num_classes=num_classes,
                                tile_m=128, tile_k=128)
    jax.block_until_ready((probs, logits))

    assert probs.shape == (num_nodes, num_classes)
    assert logits.shape == (num_nodes, num_classes)
    # exact-divide softmax: rows sum to 1 in f32
    assert jnp.allclose(jnp.sum(probs, axis=1), 1.0, atol=1e-4)

    ref_probs, ref_logits = gnn_reference(x, edge_index, params, num_nodes)
    # bf16 aggregation operands (A, X, H) vs the pure-f32 reference ->
    # tolerances loosened to cover ~0.4% relative bf16 rounding of X and H.
    assert jnp.allclose(logits, ref_logits, atol=8e-2, rtol=8e-2), \
        float(jnp.max(jnp.abs(logits - ref_logits)))
    assert jnp.allclose(probs, ref_probs, atol=4e-2), \
        float(jnp.max(jnp.abs(probs - ref_probs)))

    print("KERNEL_OK")
</pallas_src>

<mosaic_0001>
module attributes {stable_mosaic.version = 11 : i64} {
  func.func @sage1_kernel(%arg0: i32, %arg1: i32, %arg2: memref<128x128xbf16, #tpu.memory_space<vmem>>, %arg3: memref<128x1xf32, #tpu.memory_space<vmem>>, %arg4: memref<128x128xbf16, #tpu.memory_space<vmem>>, %arg5: memref<128x128xbf16, #tpu.memory_space<vmem>>, %arg6: memref<128x128xf32, #tpu.memory_space<vmem>>, %arg7: memref<128x128xf32, #tpu.memory_space<vmem>>, %arg8: memref<1x128xf32, #tpu.memory_space<vmem>>, %arg9: memref<128x128xbf16, #tpu.memory_space<vmem>>, %arg10: memref<128x128xf32, #tpu.memory_space<vmem>>) attributes {dimension_semantics = [#tpu.dimension_semantics<parallel>, #tpu.dimension_semantics<arbitrary>], iteration_bounds = array<i64: 2, 2>, scalar_prefetch = 0 : i64, scratch_operands = 1 : i64, tpu.core_type = #tpu.core_type<tc>, window_params = [{transform_indices = @transform_0, window_bounds = array<i64: 128, 128>}, {transform_indices = @transform_1, window_bounds = array<i64: 128, 1>}, {transform_indices = @transform_2, window_bounds = array<i64: 128, 128>}, {transform_indices = @transform_3, window_bounds = array<i64: 128, 128>}, {pipeline_mode = #tpu.pipeline_mode<synchronous>, transform_indices = @transform_4, window_bounds = array<i64: 128, 128>}, {pipeline_mode = #tpu.pipeline_mode<synchronous>, transform_indices = @transform_5, window_bounds = array<i64: 128, 128>}, {pipeline_mode = #tpu.pipeline_mode<synchronous>, transform_indices = @transform_6, window_bounds = array<i64: 1, 128>}, {transform_indices = @transform_7, window_bounds = array<i64: 128, 128>}]} {
    %c0_i32 = arith.constant 0 : i32
    %0 = arith.cmpi eq, %arg1, %c0_i32 : i32
    %1 = arith.extui %0 : i1 to i32
    %c0_i32_0 = arith.constant 0 : i32
    %2 = arith.cmpi ne, %1, %c0_i32_0 : i32
    scf.if %2 {
      %cst_9 = arith.constant 0.000000e+00 : f32
      %12 = vector.broadcast %cst_9 : f32 to vector<128x128xf32>
      %c0_10 = arith.constant 0 : index
      %c0_11 = arith.constant 0 : index
      %13 = vector.load %arg10[%c0_10, %c0_11] : memref<128x128xf32, #tpu.memory_space<vmem>>, vector<128x128xf32>
      tpu.vector_store %arg10[%c0_10, %c0_11], %12 {strides = array<i32>} : memref<128x128xf32, #tpu.memory_space<vmem>>, vector<128x128xf32>,
    } else {
    }
    %c0 = arith.constant 0 : index
    %c0_1 = arith.constant 0 : index
    %3 = vector.load %arg10[%c0, %c0_1] : memref<128x128xf32, #tpu.memory_space<vmem>>, vector<128x128xf32>
    %c0_2 = arith.constant 0 : index
    %c0_3 = arith.constant 0 : index
    %4 = vector.load %arg2[%c0_2, %c0_3] : memref<128x128xbf16, #tpu.memory_space<vmem>>, vector<128x128xbf16>
    %c0_4 = arith.constant 0 : index
    %c0_5 = arith.constant 0 : index
    %5 = vector.load %arg4[%c0_4, %c0_5] : memref<128x128xbf16, #tpu.memory_space<vmem>>, vector<128x128xbf16>
    %cst = arith.constant dense<0.000000e+00> : vector<128x128xf32>
    %6 = tpu.matmul %4, %5, %cst {dimension_numbers = #tpu.dot_dimension_numbers<[1], [0], [0], [1], [0, 0, 1, 1], [], []>} : vector<128x128xbf16>, vector<128x128xbf16>, vector<128x128xf32> -> vector<128x128xf32>
    %7 = arith.addf %3, %6 : vector<128x128xf32>
    %c0_6 = arith.constant 0 : index
    %c0_7 = arith.constant 0 : index
    %8 = vector.load %arg10[%c0_6, %c0_7] : memref<128x128xf32, #tpu.memory_space<vmem>>, vector<128x128xf32>
    tpu.vector_store %arg10[%c0_6, %c0_7], %7 {strides = array<i32>} : memref<128x128xf32, #tpu.memory_space<vmem>>, vector<128x128xf32>,
    %c1_i32 = arith.constant 1 : i32
    %9 = arith.cmpi eq, %arg1, %c1_i32 : i32
    %10 = arith.extui %9 : i1 to i32
    %c0_i32_8 = arith.constant 0 : i32
    %11 = arith.cmpi ne, %10, %c0_i32_8 : i32
    scf.if %11 {
      %c0_9 = arith.constant 0 : index
      %c0_10 = arith.constant 0 : index
      %12 = vector.load %arg10[%c0_9, %c0_10] : memref<128x128xf32, #tpu.memory_space<vmem>>, vector<128x128xf32>
      %c0_11 = arith.constant 0 : index
      %c0_12 = arith.constant 0 : index
      %13 = vector.load %arg3[%c0_11, %c0_12] : memref<128x1xf32, #tpu.memory_space<vmem>>, vector<128x1xf32>
      %14 = vector.broadcast %13 : vector<128x1xf32> to vector<128x128xf32>
      %15 = arith.mulf %12, %14 : vector<128x128xf32>
      %c0_13 = arith.constant 0 : index
      %c0_14 = arith.constant 0 : index
      %16 = vector.load %arg5[%c0_13, %c0_14] : memref<128x128xbf16, #tpu.memory_space<vmem>>, vector<128x128xbf16>
      %17 = arith.extf %16 : vector<128x128xbf16> to vector<128x128xf32>
      %c0_15 = arith.constant 0 : index
      %c0_16 = arith.constant 0 : index
      %18 = vector.load %arg6[%c0_15, %c0_16] : memref<128x128xf32, #tpu.memory_space<vmem>>, vector<128x128xf32>
      %cst_17 = arith.constant dense<0.000000e+00> : vector<128x128xf32>
      %19 = tpu.matmul %15, %18, %cst_17 {dimension_numbers = #tpu.dot_dimension_numbers<[1], [0], [0], [1], [0, 0, 1, 1], [], []>} : vector<128x128xf32>, vector<128x128xf32>, vector<128x128xf32> -> vector<128x128xf32>
      %c0_18 = arith.constant 0 : index
      %c0_19 = arith.constant 0 : index
      %20 = vector.load %arg7[%c0_18, %c0_19] : memref<128x128xf32, #tpu.memory_space<vmem>>, vector<128x128xf32>
      %cst_20 = arith.constant dense<0.000000e+00> : vector<128x128xf32>
      %21 = tpu.matmul %17, %20, %cst_20 {dimension_numbers = #tpu.dot_dimension_numbers<[1], [0], [0], [1], [0, 0, 1, 1], [], []>} : vector<128x128xf32>, vector<128x128xf32>, vector<128x128xf32> -> vector<128x128xf32>
      %22 = arith.addf %19, %21 : vector<128x128xf32>
      %c0_21 = arith.constant 0 : index
      %c0_22 = arith.constant 0 : index
      %23 = vector.load %arg8[%c0_21, %c0_22] : memref<1x128xf32, #tpu.memory_space<vmem>>, vector<1x128xf32>
      %24 = vector.broadcast %23 : vector<1x128xf32> to vector<128x128xf32>
      %25 = arith.addf %22, %24 : vector<128x128xf32>
      %cst_23 = arith.constant 0.000000e+00 : f32
      %26 = vector.broadcast %cst_23 : f32 to vector<128x128xf32>
      %27 = arith.maximumf %25, %26 : vector<128x128xf32>
      %28 = arith.truncf %27 : vector<128x128xf32> to vector<128x128xbf16>
      %c0_24 = arith.constant 0 : index
      %c0_25 = arith.constant 0 : index
      %29 = vector.load %arg9[%c0_24, %c0_25] : memref<128x128xbf16, #tpu.memory_space<vmem>>, vector<128x128xbf16>
      tpu.vector_store %arg9[%c0_24, %c0_25], %28 {strides = array<i32>} : memref<128x128xbf16, #tpu.memory_space<vmem>>, vector<128x128xbf16>,
    } else {
    }
    return
  }
  func.func @transform_0(%arg0: i32, %arg1: i32) -> (i32, i32) {
    %c0_i32 = arith.constant 0 : i32
    return %arg0, %arg1 : i32, i32
  }
  func.func @transform_1(%arg0: i32, %arg1: i32) -> (i32, i32) {
    %c0_i32 = arith.constant 0 : i32
    %c0_i32_0 = arith.constant 0 : i32
    return %arg0, %c0_i32 : i32, i32
  }
  func.func @transform_2(%arg0: i32, %arg1: i32) -> (i32, i32) {
    %c0_i32 = arith.constant 0 : i32
    %c0_i32_0 = arith.constant 0 : i32
    return %arg1, %c0_i32 : i32, i32
  }
  func.func @transform_3(%arg0: i32, %arg1: i32) -> (i32, i32) {
    %c0_i32 = arith.constant 0 : i32
    %c0_i32_0 = arith.constant 0 : i32
    return %arg0, %c0_i32 : i32, i32
  }
  func.func @transform_4(%arg0: i32, %arg1: i32) -> (i32, i32) {
    %c0_i32 = arith.constant 0 : i32
    %c0_i32_0 = arith.constant 0 : i32
    %c0_i32_1 = arith.constant 0 : i32
    return %c0_i32, %c0_i32_0 : i32, i32
  }
  func.func @transform_5(%arg0: i32, %arg1: i32) -> (i32, i32) {
    %c0_i32 = arith.constant 0 : i32
    %c0_i32_0 = arith.constant 0 : i32
    %c0_i32_1 = arith.constant 0 : i32
    return %c0_i32, %c0_i32_0 : i32, i32
  }
  func.func @transform_6(%arg0: i32, %arg1: i32) -> (i32, i32) {
    %c0_i32 = arith.constant 0 : i32
    %c0_i32_0 = arith.constant 0 : i32
    %c0_i32_1 = arith.constant 0 : i32
    return %c0_i32, %c0_i32_0 : i32, i32
  }
  func.func @transform_7(%arg0: i32, %arg1: i32) -> (i32, i32) {
    %c0_i32 = arith.constant 0 : i32
    %c0_i32_0 = arith.constant 0 : i32
    return %arg0, %c0_i32 : i32, i32
  }
}

module attributes {stable_mosaic.version = 11 : i64} {
  func.func @sage2_kernel(%arg0: i32, %arg1: i32, %arg2: memref<128x128xbf16, #tpu.memory_space<vmem>>, %arg3: memref<128x1xf32, #tpu.memory_space<vmem>>, %arg4: memref<128x128xbf16, #tpu.memory_space<vmem>>, %arg5: memref<128x128xbf16, #tpu.memory_space<vmem>>, %arg6: memref<128x128xf32, #tpu.memory_space<vmem>>, %arg7: memref<128x128xf32, #tpu.memory_space<vmem>>, %arg8: memref<1x128xf32, #tpu.memory_space<vmem>>, %arg9: memref<128x128xf32, #tpu.memory_space<vmem>>, %arg10: memref<128x128xf32, #tpu.memory_space<vmem>>, %arg11: memref<128x128xf32, #tpu.memory_space<vmem>>) attributes {dimension_semantics = [#tpu.dimension_semantics<parallel>, #tpu.dimension_semantics<arbitrary>], iteration_bounds = array<i64: 2, 2>, scalar_prefetch = 0 : i64, scratch_operands = 1 : i64, tpu.core_type = #tpu.core_type<tc>, window_params = [{transform_indices = @transform_0, window_bounds = array<i64: 128, 128>}, {transform_indices = @transform_1, window_bounds = array<i64: 128, 1>}, {transform_indices = @transform_2, window_bounds = array<i64: 128, 128>}, {transform_indices = @transform_3, window_bounds = array<i64: 128, 128>}, {pipeline_mode = #tpu.pipeline_mode<synchronous>, transform_indices = @transform_4, window_bounds = array<i64: 128, 128>}, {pipeline_mode = #tpu.pipeline_mode<synchronous>, transform_indices = @transform_5, window_bounds = array<i64: 128, 128>}, {pipeline_mode = #tpu.pipeline_mode<synchronous>, transform_indices = @transform_6, window_bounds = array<i64: 1, 128>}, {transform_indices = @transform_7, window_bounds = array<i64: 128, 128>}, {transform_indices = @transform_8, window_bounds = array<i64: 128, 128>}]} {
    %c0_i32 = arith.constant 0 : i32
    %0 = arith.cmpi eq, %arg1, %c0_i32 : i32
    %1 = arith.extui %0 : i1 to i32
    %c0_i32_0 = arith.constant 0 : i32
    %2 = arith.cmpi ne, %1, %c0_i32_0 : i32
    scf.if %2 {
      %cst_9 = arith.constant 0.000000e+00 : f32
      %12 = vector.broadcast %cst_9 : f32 to vector<128x128xf32>
      %c0_10 = arith.constant 0 : index
      %c0_11 = arith.constant 0 : index
      %13 = vector.load %arg11[%c0_10, %c0_11] : memref<128x128xf32, #tpu.memory_space<vmem>>, vector<128x128xf32>
      tpu.vector_store %arg11[%c0_10, %c0_11], %12 {strides = array<i32>} : memref<128x128xf32, #tpu.memory_space<vmem>>, vector<128x128xf32>,
    } else {
    }
    %c0 = arith.constant 0 : index
    %c0_1 = arith.constant 0 : index
    %3 = vector.load %arg11[%c0, %c0_1] : memref<128x128xf32, #tpu.memory_space<vmem>>, vector<128x128xf32>
    %c0_2 = arith.constant 0 : index
    %c0_3 = arith.constant 0 : index
    %4 = vector.load %arg2[%c0_2, %c0_3] : memref<128x128xbf16, #tpu.memory_space<vmem>>, vector<128x128xbf16>
    %c0_4 = arith.constant 0 : index
    %c0_5 = arith.constant 0 : index
    %5 = vector.load %arg4[%c0_4, %c0_5] : memref<128x128xbf16, #tpu.memory_space<vmem>>, vector<128x128xbf16>
    %cst = arith.constant dense<0.000000e+00> : vector<128x128xf32>
    %6 = tpu.matmul %4, %5, %cst {dimension_numbers = #tpu.dot_dimension_numbers<[1], [0], [0], [1], [0, 0, 1, 1], [], []>} : vector<128x128xbf16>, vector<128x128xbf16>, vector<128x128xf32> -> vector<128x128xf32>
    %7 = arith.addf %3, %6 : vector<128x128xf32>
    %c0_6 = arith.constant 0 : index
    %c0_7 = arith.constant 0 : index
    %8 = vector.load %arg11[%c0_6, %c0_7] : memref<128x128xf32, #tpu.memory_space<vmem>>, vector<128x128xf32>
    tpu.vector_store %arg11[%c0_6, %c0_7], %7 {strides = array<i32>} : memref<128x128xf32, #tpu.memory_space<vmem>>, vector<128x128xf32>,
    %c1_i32 = arith.constant 1 : i32
    %9 = arith.cmpi eq, %arg1, %c1_i32 : i32
    %10 = arith.extui %9 : i1 to i32
    %c0_i32_8 = arith.constant 0 : i32
    %11 = arith.cmpi ne, %10, %c0_i32_8 : i32
    scf.if %11 {
      %c0_9 = arith.constant 0 : index
      %c0_10 = arith.constant 0 : index
      %12 = vector.load %arg11[%c0_9, %c0_10] : memref<128x128xf32, #tpu.memory_space<vmem>>, vector<128x128xf32>
      %c0_11 = arith.constant 0 : index
      %c0_12 = arith.constant 0 : index
      %13 = vector.load %arg3[%c0_11, %c0_12] : memref<128x1xf32, #tpu.memory_space<vmem>>, vector<128x1xf32>
      %14 = vector.broadcast %13 : vector<128x1xf32> to vector<128x128xf32>
      %15 = arith.mulf %12, %14 : vector<128x128xf32>
      %c0_13 = arith.constant 0 : index
      %c0_14 = arith.constant 0 : index
      %16 = vector.load %arg5[%c0_13, %c0_14] : memref<128x128xbf16, #tpu.memory_space<vmem>>, vector<128x128xbf16>
      %17 = arith.extf %16 : vector<128x128xbf16> to vector<128x128xf32>
      %c0_15 = arith.constant 0 : index
      %c0_16 = arith.constant 0 : index
      %18 = vector.load %arg6[%c0_15, %c0_16] : memref<128x128xf32, #tpu.memory_space<vmem>>, vector<128x128xf32>
      %cst_17 = arith.constant dense<0.000000e+00> : vector<128x128xf32>
      %19 = tpu.matmul %15, %18, %cst_17 {dimension_numbers = #tpu.dot_dimension_numbers<[1], [0], [0], [1], [0, 0, 1, 1], [], []>} : vector<128x128xf32>, vector<128x128xf32>, vector<128x128xf32> -> vector<128x128xf32>
      %c0_18 = arith.constant 0 : index
      %c0_19 = arith.constant 0 : index
      %20 = vector.load %arg7[%c0_18, %c0_19] : memref<128x128xf32, #tpu.memory_space<vmem>>, vector<128x128xf32>
      %cst_20 = arith.constant dense<0.000000e+00> : vector<128x128xf32>
      %21 = tpu.matmul %17, %20, %cst_20 {dimension_numbers = #tpu.dot_dimension_numbers<[1], [0], [0], [1], [0, 0, 1, 1], [], []>} : vector<128x128xf32>, vector<128x128xf32>, vector<128x128xf32> -> vector<128x128xf32>
      %22 = arith.addf %19, %21 : vector<128x128xf32>
      %c0_21 = arith.constant 0 : index
      %c0_22 = arith.constant 0 : index
      %23 = vector.load %arg8[%c0_21, %c0_22] : memref<1x128xf32, #tpu.memory_space<vmem>>, vector<1x128xf32>
      %24 = vector.broadcast %23 : vector<1x128xf32> to vector<128x128xf32>
      %25 = arith.addf %22, %24 : vector<128x128xf32>
      %c0_23 = arith.constant 0 : index
      %c0_24 = arith.constant 0 : index
      %26 = vector.load %arg10[%c0_23, %c0_24] : memref<128x128xf32, #tpu.memory_space<vmem>>, vector<128x128xf32>
      tpu.vector_store %arg10[%c0_23, %c0_24], %25 {strides = array<i32>} : memref<128x128xf32, #tpu.memory_space<vmem>>, vector<128x128xf32>,
      %27 = tpu.iota {dimensions = array<i32: 1>} : vector<128x128xi32>
      %c4_i32 = arith.constant 4 : i32
      %28 = vector.broadcast %c4_i32 : i32 to vector<128x128xi32>
      %29 = arith.cmpi slt, %27, %28 : vector<128x128xi32>
      %cst_25 = arith.constant -1.000000e+30 : f32
      %30 = vector.broadcast %cst_25 : f32 to vector<128x128xf32>
      %31 = arith.select %29, %25, %30 : vector<128x128xi1>, vector<128x128xf32>
      %cst_26 = arith.constant dense<0xFF800000> : vector<128xf32>
      %32 = vector.multi_reduction <maximumf>, %31, %cst_26 [1] : vector<128x128xf32> to vector<128xf32>
      %33 = vector.shape_cast %32 : vector<128xf32> to vector<128x1xf32>
      %34 = vector.broadcast %33 : vector<128x1xf32> to vector<128x128xf32>
      %35 = arith.subf %31, %34 : vector<128x128xf32>
      %36 = math.exp %35 : vector<128x128xf32>
      %cst_27 = arith.constant 0.000000e+00 : f32
      %37 = vector.broadcast %cst_27 : f32 to vector<128x128xf32>
      %38 = arith.select %29, %36, %37 : vector<128x128xi1>, vector<128x128xf32>
      %cst_28 = arith.constant dense<0.000000e+00> : vector<128xf32>
      %39 = vector.multi_reduction <add>, %38, %cst_28 [1] : vector<128x128xf32> to vector<128xf32>
      %40 = vector.shape_cast %39 : vector<128xf32> to vector<128x1xf32>
      %41 = vector.broadcast %40 : vector<128x1xf32> to vector<128x128xf32>
      %42 = arith.divf %38, %41 : vector<128x128xf32>
      %c0_29 = arith.constant 0 : index
      %c0_30 = arith.constant 0 : index
      %43 = vector.load %arg9[%c0_29, %c0_30] : memref<128x128xf32, #tpu.memory_space<vmem>>, vector<128x128xf32>
      tpu.vector_store %arg9[%c0_29, %c0_30], %42 {strides = array<i32>} : memref<128x128xf32, #tpu.memory_space<vmem>>, vector<128x128xf32>,
    } else {
    }
    return
  }
  func.func @transform_0(%arg0: i32, %arg1: i32) -> (i32, i32) {
    %c0_i32 = arith.constant 0 : i32
    return %arg0, %arg1 : i32, i32
  }
  func.func @transform_1(%arg0: i32, %arg1: i32) -> (i32, i32) {
    %c0_i32 = arith.constant 0 : i32
    %c0_i32_0 = arith.constant 0 : i32
    return %arg0, %c0_i32 : i32, i32
  }
  func.func @transform_2(%arg0: i32, %arg1: i32) -> (i32, i32) {
    %c0_i32 = arith.constant 0 : i32
    %c0_i32_0 = arith.constant 0 : i32
    return %arg1, %c0_i32 : i32, i32
  }
  func.func @transform_3(%arg0: i32, %arg1: i32) -> (i32, i32) {
    %c0_i32 = arith.constant 0 : i32
    %c0_i32_0 = arith.constant 0 : i32
    return %arg0, %c0_i32 : i32, i32
  }
  func.func @transform_4(%arg0: i32, %arg1: i32) -> (i32, i32) {
    %c0_i32 = arith.constant 0 : i32
    %c0_i32_0 = arith.constant 0 : i32
    %c0_i32_1 = arith.constant 0 : i32
    return %c0_i32, %c0_i32_0 : i32, i32
  }
  func.func @transform_5(%arg0: i32, %arg1: i32) -> (i32, i32) {
    %c0_i32 = arith.constant 0 : i32
    %c0_i32_0 = arith.constant 0 : i32
    %c0_i32_1 = arith.constant 0 : i32
    return %c0_i32, %c0_i32_0 : i32, i32
  }
  func.func @transform_6(%arg0: i32, %arg1: i32) -> (i32, i32) {
    %c0_i32 = arith.constant 0 : i32
    %c0_i32_0 = arith.constant 0 : i32
    %c0_i32_1 = arith.constant 0 : i32
    return %c0_i32, %c0_i32_0 : i32, i32
  }
  func.func @transform_7(%arg0: i32, %arg1: i32) -> (i32, i32) {
    %c0_i32 = arith.constant 0 : i32
    %c0_i32_0 = arith.constant 0 : i32
    return %arg0, %c0_i32 : i32, i32
  }
  func.func @transform_8(%arg0: i32, %arg1: i32) -> (i32, i32) {
    %c0_i32 = arith.constant 0 : i32
    %c0_i32_0 = arith.constant 0 : i32
    return %arg0, %c0_i32 : i32, i32
  }
}

</mosaic_0001>

<llo_original>
// kernel: gnn_forward.3
$region0: #{gnn_forward.3}
  #allocation0 [shape = 'u32[]', space=smem, size = 0x4, offset = 0x4, fixed_abs, tag = 'smem constant byte address 0x4 - core index']
  #allocation1 [shape = 'u32[72,128]{1,0:T(1,128)}', space=vmem, size = 0x9000, scoped, tag = 'internal scratch']
  #allocation2 [shape = 'f32[128,128]{1,0:T(8,128)}', space=vmem, size = 0x10000, scoped, tag = 'scratch operand']
  %s0 = inlined_call_operand.vmem [shape: bf16[256,256], index: 0, kind: input, shape index: {}]
  %s1 = inlined_call_operand.vmem [shape: f32[256,1], index: 1, kind: input, shape index: {}]
  %s2 = inlined_call_operand.vmem [shape: bf16[256,128], index: 2, kind: input, shape index: {}, may-alias: {2,3}]
  %s3 = inlined_call_operand.vmem [shape: bf16[256,128], index: 3, kind: input, shape index: {}, may-alias: {2,3}]
  %s4 = inlined_call_operand.vmem [shape: f32[128,128], index: 4, kind: input, shape index: {}]
  %s5 = inlined_call_operand.vmem [shape: f32[128,128], index: 5, kind: input, shape index: {}]
  %s6 = inlined_call_operand.vmem [shape: f32[1,128], index: 6, kind: input, shape index: {}]
  %s7 = inlined_call_operand.vmem [shape: f32[256,128], index: 7, kind: output, shape index: {0}]
  %s8 = inlined_call_operand.vmem [shape: f32[256,128], index: 8, kind: output, shape index: {1}]
  %9 = xla_tuple %s7, %s8
  %s10 = sld [smem:[#allocation0]]
  $region118: #{gnn_forward.3} parent=0
    _
  %s12 = ssub.s32 1, %s10
  %s13 = scalar_select 0, %s12, %s10
  $region1: #{gnn_forward.3} parent=0
    #allocation3 [shape = 'u8[65536]{0}', space=vmem, size = 0x10000, scoped, tag = 'input window, operand 0']
    loop: start=0, step=1, limit=6
    $region2: #{gnn_forward.3} parent=1 // loop_pre_header
      _
    $region3: #{gnn_forward.3} parent=1 // loop_header
      %s15 = sphi 0, %s19
      %p16 = scmp.ge.s32.totalorder %s15, 6
      %s22 = sphi 0, %s34
      %s23 = sphi 0, %s30
      %s24 = sphi 0, %s22
      %s25 = sphi 0, %s23
      %s26 = sphi 0, %s24
      %s27 = sphi 0, %s25
      %s39 = sphi 0, %s41
      %s42 = sphi 0, %s39
      %s43 = sphi 0, %s42
      %s59 = sphi 0, %s43
      %s65 = sphi 0, %s67
      %s68 = sphi 0, %s65
      %s69 = sphi 0, %s68
      %s85 = sphi 0, %s69
      %s91 = sphi 0, %s93
      %s94 = sphi 0, %s91
      %s95 = sphi 0, %s94
      %s111 = sphi 0, %s95
      %s117 = sphi 0, %s119
      %s120 = sphi 0, %s117
      %s121 = sphi 0, %s120
      %s137 = sphi 0, %s121
      %s141 = sphi 0, %s141
      %s143 = sphi 0, %s141
      %s144 = sphi 0, %s143
      %s158 = sphi 0, %s144
      %s162 = sphi 0, %s162
      %s164 = sphi 0, %s162
      %s165 = sphi 0, %s164
      %s179 = sphi 0, %s165
      %s183 = sphi 0, %s183
      %s185 = sphi 0, %s183
      %s186 = sphi 0, %s185
      %s200 = sphi 0, %s186
      %s206 = sphi 0, %s208
      %s209 = sphi 0, %s206
      %s210 = sphi 0, %s209
      %s226 = sphi 0, %s210
      %s232 = sphi 0, %s234
      %s235 = sphi 0, %s232
      %s236 = sphi 0, %s235
      %s252 = sphi 0, %s236
    $region4: #{gnn_forward.3} parent=1 // loop_header_branch
      %18 = sbr.rel (%p16) target = $region8
    $region5: #{gnn_forward.3} parent=1 // loop_body
      %s20 = ssub.s32 %s15, 1
      %s21 = ssub.s32 %s15, 2
      %s28 = sadd.s32 1, %s23
      %p29 = scmp.ge.s32.totalorder %s28, 2
      %s30 = scalar_select %p29, 0, %s28
      %s31 = sadd.s32 1, %s22
      %s32 = scalar_select %p29, %s31, %s22
      %p33 = scmp.ge.s32.totalorder %s32, 2
      %s34 = scalar_select %p33, 0, %s32
      %s35 = ssub.s32 %s22, %s34
      %s36 = ssub.s32 %s23, %s30
      %s37 = sor.u32 %s35, %s36
      %p38 = scmp.eq.s32.totalorder %s37, 0
      %s40 = sadd.s32 %s39, 1
      %s41 = scalar_select %p38, %s39, %s40
      %p44 = pneg %p38
      %p45 = scmp.eq.s32.totalorder %s15, 3
      %p46 = por %p44, %p45
      %p47 = scmp.ne.s32.totalorder %s39, %s42
      %p48 = scmp.eq.s32.totalorder %s15, 0
      %p49 = por %p47, %p48
      %p50 = scmp.ne.s32.totalorder %s39, %s42
      %p51 = scmp.eq.s32.totalorder %s20, 3
      %p52 = por %p50, %p51
      %p53 = scmp.ne.s32.totalorder %s42, %s43
      %p54 = scmp.eq.s32.totalorder %s20, 0
      %p55 = por %p53, %p54
      %p56 = scmp.ne.s32.totalorder %s42, %s43
      %p57 = scmp.eq.s32.totalorder %s21, 3
      %p58 = por %p56, %p57
      %p60 = scmp.ne.s32.totalorder %s43, %s59
      %p61 = scmp.eq.s32.totalorder %s21, 0
      %p62 = por %p60, %p61
      %s63 = ssub.s32 %s22, %s34
      %p64 = scmp.eq.s32.totalorder %s63, 0
      %s66 = sadd.s32 %s65, 1
      %s67 = scalar_select %p64, %s65, %s66
      %p70 = pneg %p64
      %p71 = scmp.eq.s32.totalorder %s15, 3
      %p72 = por %p70, %p71
      %p73 = scmp.ne.s32.totalorder %s65, %s68
      %p74 = scmp.eq.s32.totalorder %s15, 0
      %p75 = por %p73, %p74
      %p76 = scmp.ne.s32.totalorder %s65, %s68
      %p77 = scmp.eq.s32.totalorder %s20, 3
      %p78 = por %p76, %p77
      %p79 = scmp.ne.s32.totalorder %s68, %s69
      %p80 = scmp.eq.s32.totalorder %s20, 0
      %p81 = por %p79, %p80
      %p82 = scmp.ne.s32.totalorder %s68, %s69
      %p83 = scmp.eq.s32.totalorder %s21, 3
      %p84 = por %p82, %p83
      %p86 = scmp.ne.s32.totalorder %s69, %s85
      %p87 = scmp.eq.s32.totalorder %s21, 0
      %p88 = por %p86, %p87
      %s89 = ssub.s32 %s23, %s30
      %p90 = scmp.eq.s32.totalorder %s89, 0
      %s92 = sadd.s32 %s91, 1
      %s93 = scalar_select %p90, %s91, %s92
      %p96 = pneg %p90
      %p97 = scmp.eq.s32.totalorder %s15, 3
      %p98 = por %p96, %p97
      %p99 = scmp.ne.s32.totalorder %s91, %s94
      %p100 = scmp.eq.s32.totalorder %s15, 0
      %p101 = por %p99, %p100
      %p102 = scmp.ne.s32.totalorder %s91, %s94
      %p103 = scmp.eq.s32.totalorder %s20, 3
      %p104 = por %p102, %p103
      %p105 = scmp.ne.s32.totalorder %s94, %s95
      %p106 = scmp.eq.s32.totalorder %s20, 0
      %p107 = por %p105, %p106
      %p108 = scmp.ne.s32.totalorder %s94, %s95
      %p109 = scmp.eq.s32.totalorder %s21, 3
      %p110 = por %p108, %p109
      %p112 = scmp.ne.s32.totalorder %s95, %s111
      %p113 = scmp.eq.s32.totalorder %s21, 0
      %p114 = por %p112, %p113
      %s115 = ssub.s32 %s22, %s34
      %p116 = scmp.eq.s32.totalorder %s115, 0
      %s118 = sadd.s32 %s117, 1
      %s119 = scalar_select %p116, %s117, %s118
      %p122 = pneg %p116
      %p123 = scmp.eq.s32.totalorder %s15, 3
      %p124 = por %p122, %p123
      %p125 = scmp.ne.s32.totalorder %s117, %s120
      %p126 = scmp.eq.s32.totalorder %s15, 0
      %p127 = por %p125, %p126
      %p128 = scmp.ne.s32.totalorder %s117, %s120
      %p129 = scmp.eq.s32.totalorder %s20, 3
      %p130 = por %p128, %p129
      %p131 = scmp.ne.s32.totalorder %s120, %s121
      %p132 = scmp.eq.s32.totalorder %s20, 0
      %p133 = por %p131, %p132
      %p134 = scmp.ne.s32.totalorder %s120, %s121
      %p135 = scmp.eq.s32.totalorder %s21, 3
      %p136 = por %p134, %p135
      %p138 = scmp.ne.s32.totalorder %s121, %s137
      %p139 = scmp.eq.s32.totalorder %s21, 0
      %p140 = por %p138, %p139
      %s142 = sadd.s32 %s141, 1
      %p145 = scmp.eq.s32.totalorder %s15, 3
      %p146 = scmp.ne.s32.totalorder %s141, %s143
      %p147 = scmp.eq.s32.totalorder %s15, 0
      %p148 = por %p146, %p147
      %p149 = scmp.ne.s32.totalorder %s141, %s143
      %p150 = scmp.eq.s32.totalorder %s20, 3
      %p151 = por %p149, %p150
      %p152 = scmp.ne.s32.totalorder %s143, %s144
      %p153 = scmp.eq.s32.totalorder %s20, 0
      %p154 = por %p152, %p153
      %p155 = scmp.ne.s32.totalorder %s143, %s144
      %p156 = scmp.eq.s32.totalorder %s21, 3
      %p157 = por %p155, %p156
      %p159 = scmp.ne.s32.totalorder %s144, %s158
      %p160 = scmp.eq.s32.totalorder %s21, 0
      %p161 = por %p159, %p160
      %s163 = sadd.s32 %s162, 1
      %p166 = scmp.eq.s32.totalorder %s15, 3
      %p167 = scmp.ne.s32.totalorder %s162, %s164
      %p168 = scmp.eq.s32.totalorder %s15, 0
      %p169 = por %p167, %p168
      %p170 = scmp.ne.s32.totalorder %s162, %s164
      %p171 = scmp.eq.s32.totalorder %s20, 3
      %p172 = por %p170, %p171
      %p173 = scmp.ne.s32.totalorder %s164, %s165
      %p174 = scmp.eq.s32.totalorder %s20, 0
      %p175 = por %p173, %p174
      %p176 = scmp.ne.s32.totalorder %s164, %s165
      %p177 = scmp.eq.s32.totalorder %s21, 3
      %p178 = por %p176, %p177
      %p180 = scmp.ne.s32.totalorder %s165, %s179
      %p181 = scmp.eq.s32.totalorder %s21, 0
      %p182 = por %p180, %p181
      %s184 = sadd.s32 %s183, 1
      %p187 = scmp.eq.s32.totalorder %s15, 3
      %p188 = scmp.ne.s32.totalorder %s183, %s185
      %p189 = scmp.eq.s32.totalorder %s15, 0
      %p190 = por %p188, %p189
      %p191 = scmp.ne.s32.totalorder %s183, %s185
      %p192 = scmp.eq.s32.totalorder %s20, 3
      %p193 = por %p191, %p192
      %p194 = scmp.ne.s32.totalorder %s185, %s186
      %p195 = scmp.eq.s32.totalorder %s20, 0
      %p196 = por %p194, %p195
      %p197 = scmp.ne.s32.totalorder %s185, %s186
      %p198 = scmp.eq.s32.totalorder %s21, 3
      %p199 = por %p197, %p198
      %p201 = scmp.ne.s32.totalorder %s186, %s200
      %p202 = scmp.eq.s32.totalorder %s21, 0
      %p203 = por %p201, %p202
      %s204 = ssub.s32 %s22, %s34
      %p205 = scmp.eq.s32.totalorder %s204, 0
      %s207 = sadd.s32 %s206, 1
      %s208 = scalar_select %p205, %s206, %s207
      %p211 = pneg %p205
      %p212 = scmp.eq.s32.totalorder %s15, 3
      %p213 = por %p211, %p212
      %p214 = scmp.ne.s32.totalorder %s206, %s209
      %p215 = scmp.eq.s32.totalorder %s15, 0
      %p216 = por %p214, %p215
      %p217 = scmp.ne.s32.totalorder %s206, %s209
      %p218 = scmp.eq.s32.totalorder %s20, 3
      %p219 = por %p217, %p218
      %p220 = scmp.ne.s32.totalorder %s209, %s210
      %p221 = scmp.eq.s32.totalorder %s20, 0
      %p222 = por %p220, %p221
      %p223 = scmp.ne.s32.totalorder %s209, %s210
      %p224 = scmp.eq.s32.totalorder %s21, 3
      %p225 = por %p223, %p224
      %p227 = scmp.ne.s32.totalorder %s210, %s226
      %p228 = scmp.eq.s32.totalorder %s21, 0
      %p229 = por %p227, %p228
      %s230 = ssub.s32 %s22, %s34
      %p231 = scmp.eq.s32.totalorder %s230, 0
      %s233 = sadd.s32 %s232, 1
      %s234 = scalar_select %p231, %s232, %s233
      %p237 = pneg %p231
      %p238 = scmp.eq.s32.totalorder %s15, 3
      %p239 = por %p237, %p238
      %p240 = scmp.ne.s32.totalorder %s232, %s235
      %p241 = scmp.eq.s32.totalorder %s15, 0
      %p242 = por %p240, %p241
      %p243 = scmp.ne.s32.totalorder %s232, %s235
      %p244 = scmp.eq.s32.totalorder %s20, 3
      %p245 = por %p243, %p244
      %p246 = scmp.ne.s32.totalorder %s235, %s236
      %p247 = scmp.eq.s32.totalorder %s20, 0
      %p248 = por %p246, %p247
      %p249 = scmp.ne.s32.totalorder %s235, %s236
      %p250 = scmp.eq.s32.totalorder %s21, 3
      %p251 = por %p249, %p250
      %p253 = scmp.ne.s32.totalorder %s236, %s252
      %p254 = scmp.eq.s32.totalorder %s21, 0
      %p255 = por %p253, %p254
      %p256 = scmp.le.s32.totalorder 1, %s15
      %p257 = scmp.lt.s32.totalorder %s15, 5
      %p258 = pnand %p256, %p257
      %p259 = pneg %p258
      // Predicated region
      $region9: #{gnn_forward.3} parent=5 // pred_check
        _
      $region10: #{gnn_forward.3} parent=5 // pred_check_branch
        %261 = sbr.rel (%p258) target = $region12
      $region11: #{gnn_forward.3} parent=5 // pred_region
        %s262 = ssub.s32 %s15, 1
        // Predicated region
        $region13: #{gnn_forward.3} parent=11 // pred_check
          %p263 = pneg %p154
        $region14: #{gnn_forward.3} parent=11 // pred_check_branch
          %265 = sbr.rel (%p263) target = $region16
        $region15: #{gnn_forward.3} parent=11 // pred_region
          _
        $region16: #{gnn_forward.3} parent=11 // pred_fallthru
          _
        // Predicated region
        $region17: #{gnn_forward.3} parent=11 // pred_check
          %p266 = pneg %p175
        $region18: #{gnn_forward.3} parent=11 // pred_check_branch
          %268 = sbr.rel (%p266) target = $region20
        $region19: #{gnn_forward.3} parent=11 // pred_region
          _
        $region20: #{gnn_forward.3} parent=11 // pred_fallthru
          _
        // Predicated region
        $region21: #{gnn_forward.3} parent=11 // pred_check
          %p269 = pneg %p196
        $region22: #{gnn_forward.3} parent=11 // pred_check_branch
          %271 = sbr.rel (%p269) target = $region24
        $region23: #{gnn_forward.3} parent=11 // pred_region
          _
        $region24: #{gnn_forward.3} parent=11 // pred_fallthru
          _
      $region12: #{gnn_forward.3} parent=5 // pred_fallthru
        _
      %p272 = scmp.lt.s32.totalorder %s15, 4
      // Predicated region
      $region25: #{gnn_forward.3} parent=5 // pred_check
        %p273 = pneg %p272
      $region26: #{gnn_forward.3} parent=5 // pred_check_branch
        %275 = sbr.rel (%p273) target = $region28
      $region27: #{gnn_forward.3} parent=5 // pred_region
        // Predicated region
        $region29: #{gnn_forward.3} parent=27 // pred_check
          %p276 = pneg %p49
        $region30: #{gnn_forward.3} parent=27 // pred_check_branch
          %278 = sbr.rel (%p276) target = $region32
        $region31: #{gnn_forward.3} parent=27 // pred_region
          %s279 = sand.u32 %s39, 1
          %s280 = sand.u32 %s39, 1
          %s281 = smul.addr %s280, 64
          %s282 = scalar_lea.vmem [#allocation3], %s281
          %s283 = smul.u32 16, %s22
          %s284 = smul.addr %s283, 2
          %s285 = sadd.s32 %s23, %s284
          %s286 = smul.addr %s285, 4
          %s287 = scalar_lea.vmem %s0, %s286
          // Predicated region
          $region33: #{gnn_forward.3} parent=31 // pred_check
            _
          $region34: #{gnn_forward.3} parent=31 // pred_check_branch
            %289 = sbr.rel (0) target = $region36
          $region35: #{gnn_forward.3} parent=31 // pred_region
            // Predicated region
            $region37: #{gnn_forward.3} parent=35 // pred_check
              _
            $region38: #{gnn_forward.3} parent=35 // pred_check_branch
              %291 = sbr.rel target = $region40
            $region39: #{gnn_forward.3} parent=35 // pred_region
              // Predicated region
              $region52: #{gnn_forward.3} parent=39 // pred_check
                _
              $region53: #{gnn_forward.3} parent=39 // pred_check_branch
                %337 = sbr.rel (0) target = $region55
              $region54: #{gnn_forward.3} parent=39 // pred_region
                loop: start=0, step=1, limit=1
                $region56: #{gnn_forward.3} parent=54 // loop_pre_header
                  _
                $region57: #{gnn_forward.3} parent=54 // loop_header
                  %s339 = sphi 0, %s343
                  %p340 = scmp.ge.s32.totalorder %s339, 1
                  %s344 = sphi %s287, %s287
                  %s345 = sphi %s282, %s282
                $region58: #{gnn_forward.3} parent=54 // loop_header_branch
                  %342 = sbr.rel (%p340) target = $region62
                $region59: #{gnn_forward.3} parent=54 // loop_body
                  _
                $region60: #{gnn_forward.3} parent=54 // loop_footer
                  %s343 = sadd.s32 1, %s339
                $region61: #{gnn_forward.3} parent=54 // loop_footer_branch
                  %338 = sbr.rel target = $region57
                $region62: #{gnn_forward.3} parent=54 // loop_exit
                  _
                %s347 = ssub.s32 16, 1
                loop: start=0, step=1, limit=1
                $region63: #{gnn_forward.3} parent=54 // loop_pre_header
                  _
                $region64: #{gnn_forward.3} parent=54 // loop_header
                  %s349 = sphi 0, %s353
                  %p350 = scmp.ge.s32.totalorder %s349, 1
                  %s354 = sphi %s287, %s287
                  %s355 = sphi %s282, %s282
                $region65: #{gnn_forward.3} parent=54 // loop_header_branch
                  %352 = sbr.rel (%p350) target = $region69
                $region66: #{gnn_forward.3} parent=54 // loop_body
                  %v356 = vld [vmem:[%s354] sm:%s347]
                  %357 = vst [vmem:[%s355] sm:%s347] %v356
                  %v358 = vld [vmem:[%s354 + $0x8] sm:%s347]
                  %359 = vst [vmem:[%s355 + $0x4] sm:%s347] %v358
                  %v360 = vld [vmem:[%s354 + $0x10] sm:%s347]
                  %361 = vst [vmem:[%s355 + $0x8] sm:%s347] %v360
                  %v362 = vld [vmem:[%s354 + $0x18] sm:%s347]
                  %363 = vst [vmem:[%s355 + $0xc] sm:%s347] %v362
                  %v364 = vld [vmem:[%s354 + $0x20] sm:%s347]
                  %365 = vst [vmem:[%s355 + $0x10] sm:%s347] %v364
                  %v366 = vld [vmem:[%s354 + $0x28] sm:%s347]
                  %367 = vst [vmem:[%s355 + $0x14] sm:%s347] %v366
                  %v368 = vld [vmem:[%s354 + $0x30] sm:%s347]
                  %369 = vst [vmem:[%s355 + $0x18] sm:%s347] %v368
                  %v370 = vld [vmem:[%s354 + $0x38] sm:%s347]
                  %371 = vst [vmem:[%s355 + $0x1c] sm:%s347] %v370
                  %v372 = vld [vmem:[%s354 + $0x40] sm:%s347]
                  %373 = vst [vmem:[%s355 + $0x20] sm:%s347] %v372
                  %v374 = vld [vmem:[%s354 + $0x48] sm:%s347]
                  %375 = vst [vmem:[%s355 + $0x24] sm:%s347] %v374
                  %v376 = vld [vmem:[%s354 + $0x50] sm:%s347]
                  %377 = vst [vmem:[%s355 + $0x28] sm:%s347] %v376
                  %v378 = vld [vmem:[%s354 + $0x58] sm:%s347]
                  %379 = vst [vmem:[%s355 + $0x2c] sm:%s347] %v378
                  %v380 = vld [vmem:[%s354 + $0x60] sm:%s347]
                  %381 = vst [vmem:[%s355 + $0x30] sm:%s347] %v380
                  %v382 = vld [vmem:[%s354 + $0x68] sm:%s347]
                  %383 = vst [vmem:[%s355 + $0x34] sm:%s347] %v382
                  %v384 = vld [vmem:[%s354 + $0x70] sm:%s347]
                  %385 = vst [vmem:[%s355 + $0x38] sm:%s347] %v384
                  %v386 = vld [vmem:[%s354 + $0x78] sm:%s347]
                  %387 = vst [vmem:[%s355 + $0x3c] sm:%s347] %v386
                $region67: #{gnn_forward.3} parent=54 // loop_footer
                  %s353 = sadd.s32 1, %s349
                $region68: #{gnn_forward.3} parent=54 // loop_footer_branch
                  %348 = sbr.rel target = $region64
                $region69: #{gnn_forward.3} parent=54 // loop_exit
                  _
              $region55: #{gnn_forward.3} parent=39 // pred_fallthru
                _
            $region40: #{gnn_forward.3} parent=35 // pred_fallthru
              _
            // Predicated region
            $region41: #{gnn_forward.3} parent=35 // pred_check
              _
            $region42: #{gnn_forward.3} parent=35 // pred_check_branch
              %293 = sbr.rel (0) target = $region44
            $region43: #{gnn_forward.3} parent=35 // pred_region
              %s295 = ssub.s32 16, 1
              loop: start=0, step=1, limit=1
              $region45: #{gnn_forward.3} parent=43 // loop_pre_header
                _
              $region46: #{gnn_forward.3} parent=43 // loop_header
                %s297 = sphi 0, %s301
                %p298 = scmp.ge.s32.totalorder %s297, 1
                %s302 = sphi %s287, %s287
                %s303 = sphi %s282, %s282
              $region47: #{gnn_forward.3} parent=43 // loop_header_branch
                %300 = sbr.rel (%p298) target = $region51
              $region48: #{gnn_forward.3} parent=43 // loop_body
                %v304 = vld [vmem:[%s302] sm:%s295]
                %305 = vst [vmem:[%s303] sm:%s295] %v304
                %v306 = vld [vmem:[%s302 + $0x8] sm:%s295]
                %307 = vst [vmem:[%s303 + $0x4] sm:%s295] %v306
                %v308 = vld [vmem:[%s302 + $0x10] sm:%s295]
                %309 = vst [vmem:[%s303 + $0x8] sm:%s295] %v308
                %v310 = vld [vmem:[%s302 + $0x18] sm:%s295]
                %311 = vst [vmem:[%s303 + $0xc] sm:%s295] %v310
                %v312 = vld [vmem:[%s302 + $0x20] sm:%s295]
                %313 = vst [vmem:[%s303 + $0x10] sm:%s295] %v312
                %v314 = vld [vmem:[%s302 + $0x28] sm:%s295]
                %315 = vst [vmem:[%s303 + $0x14] sm:%s295] %v314
                %v316 = vld [vmem:[%s302 + $0x30] sm:%s295]
                %317 = vst [vmem:[%s303 + $0x18] sm:%s295] %v316
                %v318 = vld [vmem:[%s302 + $0x38] sm:%s295]
                %319 = vst [vmem:[%s303 + $0x1c] sm:%s295] %v318
                %v320 = vld [vmem:[%s302 + $0x40] sm:%s295]
                %321 = vst [vmem:[%s303 + $0x20] sm:%s295] %v320
                %v322 = vld [vmem:[%s302 + $0x48] sm:%s295]
                %323 = vst [vmem:[%s303 + $0x24] sm:%s295] %v322
                %v324 = vld [vmem:[%s302 + $0x50] sm:%s295]
                %325 = vst [vmem:[%s303 + $0x28] sm:%s295] %v324
                %v326 = vld [vmem:[%s302 + $0x58] sm:%s295]
                %327 = vst [vmem:[%s303 + $0x2c] sm:%s295] %v326
                %v328 = vld [vmem:[%s302 + $0x60] sm:%s295]
                %329 = vst [vmem:[%s303 + $0x30] sm:%s295] %v328
                %v330 = vld [vmem:[%s302 + $0x68] sm:%s295]
                %331 = vst [vmem:[%s303 + $0x34] sm:%s295] %v330
                %v332 = vld [vmem:[%s302 + $0x70] sm:%s295]
                %333 = vst [vmem:[%s303 + $0x38] sm:%s295] %v332
                %v334 = vld [vmem:[%s302 + $0x78] sm:%s295]
                %335 = vst [vmem:[%s303 + $0x3c] sm:%s295] %v334
              $region49: #{gnn_forward.3} parent=43 // loop_footer
                %s301 = sadd.s32 1, %s297
              $region50: #{gnn_forward.3} parent=43 // loop_footer_branch
                %296 = sbr.rel target = $region46
              $region51: #{gnn_forward.3} parent=43 // loop_exit
                _
            $region44: #{gnn_forward.3} parent=35 // pred_fallthru
              _
          $region36: #{gnn_forward.3} parent=31 // pred_fallthru
            _
          %388 = vnop
        $region32: #{gnn_forward.3} parent=27 // pred_fallthru
          _
        // Predicated region
        $region70: #{gnn_forward.3} parent=27 // pred_check
          %p389 = pneg %p75
        $region71: #{gnn_forward.3} parent=27 // pred_check_branch
          %391 = sbr.rel (%p389) target = $region73
        $region72: #{gnn_forward.3} parent=27 // pred_region
          %s392 = smul.u32 16, %s22
          %p393 = scmp.lt.s32.totalorder %s392, 31
          %s394 = scalar_select %p393, %s392, 31
          %s395 = smul.addr %s394, 8
          %s396 = scalar_lea.vmem %s1, %s395
          %s397 = smul.u32 16, %s22
        $region73: #{gnn_forward.3} parent=27 // pred_fallthru
          _
        // Predicated region
        $region74: #{gnn_forward.3} parent=27 // pred_check
          %p398 = pneg %p101
        $region75: #{gnn_forward.3} parent=27 // pred_check_branch
          %400 = sbr.rel (%p398) target = $region77
        $region76: #{gnn_forward.3} parent=27 // pred_region
          %s401 = smul.u32 16, %s23
          %p402 = scmp.lt.s32.totalorder %s401, 31
          %s403 = scalar_select %p402, %s401, 31
          %s404 = smul.addr %s403, 4
          %s405 = scalar_lea.vmem %s2, %s404
          %s406 = smul.u32 16, %s23
        $region77: #{gnn_forward.3} parent=27 // pred_fallthru
          _
        // Predicated region
        $region78: #{gnn_forward.3} parent=27 // pred_check
          %p407 = pneg %p127
        $region79: #{gnn_forward.3} parent=27 // pred_check_branch
          %409 = sbr.rel (%p407) target = $region81
        $region80: #{gnn_forward.3} parent=27 // pred_region
          %s410 = smul.u32 16, %s22
          %p411 = scmp.lt.s32.totalorder %s410, 31
          %s412 = scalar_select %p411, %s410, 31
          %s413 = smul.addr %s412, 4
          %s414 = scalar_lea.vmem %s3, %s413
          %s415 = smul.u32 16, %s22
        $region81: #{gnn_forward.3} parent=27 // pred_fallthru
          _
      $region28: #{gnn_forward.3} parent=5 // pred_fallthru
        _
      %p416 = scmp.le.s32.totalorder 1, %s15
      %p417 = scmp.lt.s32.totalorder %s15, 5
      %p418 = pnand %p416, %p417
      %p419 = pneg %p418
      // Predicated region
      $region82: #{gnn_forward.3} parent=5 // pred_check
        _
      $region83: #{gnn_forward.3} parent=5 // pred_check_branch
        %421 = sbr.rel (%p418) target = $region85
      $region84: #{gnn_forward.3} parent=5 // pred_region
        %s422 = ssub.s32 %s15, 1
        %s423 = sand.u32 %s42, 1
        %s424 = sand.u32 %s42, 1
        %s425 = smul.addr %s424, 64
        %s426 = scalar_lea.vmem [#allocation3], %s425
        // Predicated region
        $region86: #{gnn_forward.3} parent=84 // pred_check
          %p427 = pneg %p55
        $region87: #{gnn_forward.3} parent=84 // pred_check_branch
          %429 = sbr.rel (%p427) target = $region89
        $region88: #{gnn_forward.3} parent=84 // pred_region
          _
        $region89: #{gnn_forward.3} parent=84 // pred_fallthru
          _
        %s430 = sand.u32 %s42, 1
        %s431 = sand.u32 %s42, 1
        %s432 = smul.addr %s431, 64
        %s433 = scalar_lea.vmem [#allocation3], %s432
        %p434 = pneg %p55
        %p435 = pneg %p52
        %s436 = smul.u32 16, %s24
        %p437 = scmp.lt.s32.totalorder %s436, 31
        %s438 = scalar_select %p437, %s436, 31
        %s439 = smul.addr %s438, 8
        %s440 = scalar_lea.vmem %s1, %s439
        %p441 = pneg %p81
        %p442 = pneg %p78
        %s443 = smul.u32 16, %s25
        %p444 = scmp.lt.s32.totalorder %s443, 31
        %s445 = scalar_select %p444, %s443, 31
        %s446 = smul.addr %s445, 4
        %s447 = scalar_lea.vmem %s2, %s446
        %p448 = pneg %p107
        %p449 = pneg %p104
        %s450 = smul.u32 16, %s24
        %p451 = scmp.lt.s32.totalorder %s450, 31
        %s452 = scalar_select %p451, %s450, 31
        %s453 = smul.addr %s452, 4
        %s454 = scalar_lea.vmem %s3, %s453
        %p455 = pneg %p133
        %p456 = pneg %p130
        %p457 = pneg %p154
        %p458 = pneg %p151
        %p459 = pneg %p175
        %p460 = pneg %p172
        %p461 = pneg %p196
        %p462 = pneg %p193
        %p463 = pneg %p222
        %p464 = pneg %p219
        %s465 = smul.u32 16, %s24
        %p466 = scmp.lt.s32.totalorder %s465, 31
        %s467 = scalar_select %p466, %s465, 31
        %s468 = smul.addr %s467, 8
        %s469 = scalar_lea.vmem %s7, %s468
        %p470 = pneg %p248
        %p471 = pneg %p245
        %s472 = smul.u32 16, %s24
        %p473 = scmp.lt.s32.totalorder %s472, 31
        %s474 = scalar_select %p473, %s472, 31
        %s475 = smul.addr %s474, 8
        %s476 = scalar_lea.vmem %s8, %s475
        %s477 = smul.u32 16, %s24
        %s478 = smul.u32 16, %s24
        %p479 = scmp.lt.s32.totalorder %s478, 31
        %s480 = scalar_select %p479, %s478, 31
        %s481 = smul.addr %s480, 8
        %s482 = scalar_lea.vmem %s1, %s481
        %s483 = smul.u32 16, %s24
        %s484 = smul.u32 16, %s25
        %p485 = scmp.lt.s32.totalorder %s484, 31
        %s486 = scalar_select %p485, %s484, 31
        %s487 = smul.addr %s486, 4
        %s488 = scalar_lea.vmem %s2, %s487
        %s489 = smul.u32 16, %s25
        %s490 = smul.u32 16, %s24
        %p491 = scmp.lt.s32.totalorder %s490, 31
        %s492 = scalar_select %p491, %s490, 31
        %s493 = smul.addr %s492, 4
        %s494 = scalar_lea.vmem %s3, %s493
        %s495 = smul.u32 16, %s24
        %s496 = smul.u32 16, %s24
        %p497 = scmp.lt.s32.totalorder %s496, 31
        %s498 = scalar_select %p497, %s496, 31
        %s499 = smul.addr %s498, 8
        %s500 = scalar_lea.vmem %s7, %s499
        %s501 = smul.u32 16, %s24
        %s502 = smul.u32 16, %s24
        %p503 = scmp.lt.s32.totalorder %s502, 31
        %s504 = scalar_select %p503, %s502, 31
        %s505 = smul.addr %s504, 8
        %s506 = scalar_lea.vmem %s8, %s505
        %s507 = smul.u32 16, %s24
        %p508 = scmp.eq.s32.totalorder %s25, 0
        // Predicated region
        $region90: #{gnn_forward.3} parent=84 // pred_check
          %p509 = pneg %p508
        $region91: #{gnn_forward.3} parent=84 // pred_check_branch
          %511 = sbr.rel (%p509) target = $region93
        $region92: #{gnn_forward.3} parent=84 // pred_region
          %512 = vst [vmem:[#allocation2] sm:$0xff] 0.0
          %513 = vst [vmem:[#allocation2 + $0x8] sm:$0xff] 0.0
          %514 = vst [vmem:[#allocation2 + $0x10] sm:$0xff] 0.0
          %515 = vst [vmem:[#allocation2 + $0x18] sm:$0xff] 0.0
          %516 = vst [vmem:[#allocation2 + $0x20] sm:$0xff] 0.0
          %517 = vst [vmem:[#allocation2 + $0x28] sm:$0xff] 0.0
          %518 = vst [vmem:[#allocation2 + $0x30] sm:$0xff] 0.0
          %519 = vst [vmem:[#allocation2 + $0x38] sm:$0xff] 0.0
          %520 = vst [vmem:[#allocation2 + $0x40] sm:$0xff] 0.0
          %521 = vst [vmem:[#allocation2 + $0x48] sm:$0xff] 0.0
          %522 = vst [vmem:[#allocation2 + $0x50] sm:$0xff] 0.0
          %523 = vst [vmem:[#allocation2 + $0x58] sm:$0xff] 0.0
          %524 = vst [vmem:[#allocation2 + $0x60] sm:$0xff] 0.0
          %525 = vst [vmem:[#allocation2 + $0x68] sm:$0xff] 0.0
          %526 = vst [vmem:[#allocation2 + $0x70] sm:$0xff] 0.0
          %527 = vst [vmem:[#allocation2 + $0x78] sm:$0xff] 0.0
        $region93: #{gnn_forward.3} parent=84 // pred_fallthru
          _
        %v528 = vld [vmem:[#allocation2] sm:$0xff]
        %v529 = vld [vmem:[#allocation2 + $0x8] sm:$0xff]
        %v530 = vld [vmem:[#allocation2 + $0x10] sm:$0xff]
        %v531 = vld [vmem:[#allocation2 + $0x18] sm:$0xff]
        %v532 = vld [vmem:[#allocation2 + $0x20] sm:$0xff]
        %v533 = vld [vmem:[#allocation2 + $0x28] sm:$0xff]
        %v534 = vld [vmem:[#allocation2 + $0x30] sm:$0xff]
        %v535 = vld [vmem:[#allocation2 + $0x38] sm:$0xff]
        %v536 = vld [vmem:[#allocation2 + $0x40] sm:$0xff]
        %v537 = vld [vmem:[#allocation2 + $0x48] sm:$0xff]
        %v538 = vld [vmem:[#allocation2 + $0x50] sm:$0xff]
        %v539 = vld [vmem:[#allocation2 + $0x58] sm:$0xff]
        %v540 = vld [vmem:[#allocation2 + $0x60] sm:$0xff]
        %v541 = vld [vmem:[#allocation2 + $0x68] sm:$0xff]
        %v542 = vld [vmem:[#allocation2 + $0x70] sm:$0xff]
        %v543 = vld [vmem:[#allocation2 + $0x78] sm:$0xff]
        %v544 = vld [vmem:[%s426] sm:$0xf]
        %v545 = vld [vmem:[%s426 + $0x4] sm:$0xf]
        %v546 = vld [vmem:[%s426 + $0x8] sm:$0xf]
        %v547 = vld [vmem:[%s426 + $0xc] sm:$0xf]
        %v548 = vld [vmem:[%s426 + $0x10] sm:$0xf]
        %v549 = vld [vmem:[%s426 + $0x14] sm:$0xf]
        %v550 = vld [vmem:[%s426 + $0x18] sm:$0xf]
        %v551 = vld [vmem:[%s426 + $0x1c] sm:$0xf]
        %v552 = vld [vmem:[%s426 + $0x20] sm:$0xf]
        %v553 = vld [vmem:[%s426 + $0x24] sm:$0xf]
        %v554 = vld [vmem:[%s426 + $0x28] sm:$0xf]
        %v555 = vld [vmem:[%s426 + $0x2c] sm:$0xf]
        %v556 = vld [vmem:[%s426 + $0x30] sm:$0xf]
        %v557 = vld [vmem:[%s426 + $0x34] sm:$0xf]
        %v558 = vld [vmem:[%s426 + $0x38] sm:$0xf]
        %v559 = vld [vmem:[%s426 + $0x3c] sm:$0xf]
        %v560 = vld [vmem:[%s488] sm:$0xf]
        %v561 = vld [vmem:[%s488 + $0x4] sm:$0xf]
        %v562 = vld [vmem:[%s488 + $0x8] sm:$0xf]
        %v563 = vld [vmem:[%s488 + $0xc] sm:$0xf]
        %v564 = vld [vmem:[%s488 + $0x10] sm:$0xf]
        %v565 = vld [vmem:[%s488 + $0x14] sm:$0xf]
        %v566 = vld [vmem:[%s488 + $0x18] sm:$0xf]
        %v567 = vld [vmem:[%s488 + $0x1c] sm:$0xf]
        %v568 = vld [vmem:[%s488 + $0x20] sm:$0xf]
        %v569 = vld [vmem:[%s488 + $0x24] sm:$0xf]
        %v570 = vld [vmem:[%s488 + $0x28] sm:$0xf]
        %v571 = vld [vmem:[%s488 + $0x2c] sm:$0xf]
        %v572 = vld [vmem:[%s488 + $0x30] sm:$0xf]
        %v573 = vld [vmem:[%s488 + $0x34] sm:$0xf]
        %v574 = vld [vmem:[%s488 + $0x38] sm:$0xf]
        %v575 = vld [vmem:[%s488 + $0x3c] sm:$0xf]
        %v592 = vunpack.c.l.b16 %v544
        %v593 = vunpack.c.l.b16 %v545
        %v594 = vunpack.c.l.b16 %v546
        %v595 = vunpack.c.l.b16 %v547
        %v596 = vunpack.c.l.b16 %v548
        %v597 = vunpack.c.l.b16 %v549
        %v598 = vunpack.c.l.b16 %v550
        %v599 = vunpack.c.l.b16 %v551
        %v600 = vunpack.c.l.b16 %v552
        %v601 = vunpack.c.l.b16 %v553
        %v602 = vunpack.c.l.b16 %v554
        %v603 = vunpack.c.l.b16 %v555
        %v604 = vunpack.c.l.b16 %v556
        %v605 = vunpack.c.l.b16 %v557
        %v606 = vunpack.c.l.b16 %v558
        %v607 = vunpack.c.l.b16 %v559
        %v608 = vpack.c.b16 %v593, %v592
        %v609 = vpack.c.b16 %v595, %v594
        %v610 = vpack.c.b16 %v597, %v596
        %v611 = vpack.c.b16 %v599, %v598
        %v612 = vpack.c.b16 %v601, %v600
        %v613 = vpack.c.b16 %v603, %v602
        %v614 = vpack.c.b16 %v605, %v604
        %v615 = vpack.c.b16 %v607, %v606
        %v640 = vunpack.c.l.b16 %v560
        %v641 = vunpack.c.l.b16 %v561
        %v642 = vunpack.c.l.b16 %v562
        %v643 = vunpack.c.l.b16 %v563
        %v644 = vunpack.c.l.b16 %v564
        %v645 = vunpack.c.l.b16 %v565
        %v646 = vunpack.c.l.b16 %v566
        %v647 = vunpack.c.l.b16 %v567
        %v648 = vunpack.c.l.b16 %v568
        %v649 = vunpack.c.l.b16 %v569
        %v650 = vunpack.c.l.b16 %v570
        %v651 = vunpack.c.l.b16 %v571
        %v652 = vunpack.c.l.b16 %v572
        %v653 = vunpack.c.l.b16 %v573
        %v654 = vunpack.c.l.b16 %v574
        %v655 = vunpack.c.l.b16 %v575
        %v656 = vpack.c.b16 %v641, %v640
        %v657 = vpack.c.b16 %v643, %v642
        %v658 = vpack.c.b16 %v645, %v644
        %v659 = vpack.c.b16 %v647, %v646
        %v660 = vpack.c.b16 %v649, %v648
        %v661 = vpack.c.b16 %v651, %v650
        %v662 = vpack.c.b16 %v653, %v652
        %v663 = vpack.c.b16 %v655, %v654
        %672 = vmatpush.bf16.msra.mxu0 %v663
        %673 = vmatpush.bf16.msra.mxu0 %v662
        %674 = vmatpush.bf16.msra.mxu0 %v661
        %675 = vmatpush.bf16.msra.mxu0 %v660
        %676 = vmatpush.bf16.msra.mxu0 %v659
        %677 = vmatpush.bf16.msra.mxu0 %v658
        %678 = vmatpush.bf16.msra.mxu0 %v657
        %679 = vmatpush.bf16.msra.mxu0 %v656
        %680 = vmatmul.bf16.gmra.mxu0 %v608
        %v681 = vpop.f32.mrf.mxu0
        %v682 = vadd.f32 0.0, %v681
        %v683 = vpop.f32.mrf.mxu0
        %v684 = vadd.f32 0.0, %v683
        %685 = vmatmul.bf16.gmra.mxu0 %v609
        %v686 = vpop.f32.mrf.mxu0
        %v687 = vadd.f32 0.0, %v686
        %v688 = vpop.f32.mrf.mxu0
        %v689 = vadd.f32 0.0, %v688
        %690 = vmatmul.bf16.gmra.mxu0 %v610
        %v691 = vpop.f32.mrf.mxu0
        %v692 = vadd.f32 0.0, %v691
        %v693 = vpop.f32.mrf.mxu0
        %v694 = vadd.f32 0.0, %v693
        %695 = vmatmul.bf16.gmra.mxu0 %v611
        %v696 = vpop.f32.mrf.mxu0
        %v697 = vadd.f32 0.0, %v696
        %v698 = vpop.f32.mrf.mxu0
        %v699 = vadd.f32 0.0, %v698
        %700 = vmatmul.bf16.gmra.mxu0 %v612
        %v701 = vpop.f32.mrf.mxu0
        %v702 = vadd.f32 0.0, %v701
        %v703 = vpop.f32.mrf.mxu0
        %v704 = vadd.f32 0.0, %v703
        %705 = vmatmul.bf16.gmra.mxu0 %v613
        %v706 = vpop.f32.mrf.mxu0
        %v707 = vadd.f32 0.0, %v706
        %v708 = vpop.f32.mrf.mxu0
        %v709 = vadd.f32 0.0, %v708
        %710 = vmatmul.bf16.gmra.mxu0 %v614
        %v711 = vpop.f32.mrf.mxu0
        %v712 = vadd.f32 0.0, %v711
        %v713 = vpop.f32.mrf.mxu0
        %v714 = vadd.f32 0.0, %v713
        %715 = vmatmul.bf16.gmra.mxu0 %v615
        %v716 = vpop.f32.mrf.mxu0
        %v717 = vadd.f32 0.0, %v716
        %v718 = vpop.f32.mrf.mxu0
        %v719 = vadd.f32 0.0, %v718
        %720 = vdwg.mxu0
        %v721 = vadd.f32 %v528, %v682
        %v722 = vadd.f32 %v529, %v684
        %v723 = vadd.f32 %v530, %v687
        %v724 = vadd.f32 %v531, %v689
        %v725 = vadd.f32 %v532, %v692
        %v726 = vadd.f32 %v533, %v694
        %v727 = vadd.f32 %v534, %v697
        %v728 = vadd.f32 %v535, %v699
        %v729 = vadd.f32 %v536, %v702
        %v730 = vadd.f32 %v537, %v704
        %v731 = vadd.f32 %v538, %v707
        %v732 = vadd.f32 %v539, %v709
        %v733 = vadd.f32 %v540, %v712
        %v734 = vadd.f32 %v541, %v714
        %v735 = vadd.f32 %v542, %v717
        %v736 = vadd.f32 %v543, %v719
        %737 = vst [vmem:[#allocation2] sm:$0xff] %v721
        %738 = vst [vmem:[#allocation2 + $0x8] sm:$0xff] %v722
        %739 = vst [vmem:[#allocation2 + $0x10] sm:$0xff] %v723
        %740 = vst [vmem:[#allocation2 + $0x18] sm:$0xff] %v724
        %741 = vst [vmem:[#allocation2 + $0x20] sm:$0xff] %v725
        %742 = vst [vmem:[#allocation2 + $0x28] sm:$0xff] %v726
        %743 = vst [vmem:[#allocation2 + $0x30] sm:$0xff] %v727
        %744 = vst [vmem:[#allocation2 + $0x38] sm:$0xff] %v728
        %745 = vst [vmem:[#allocation2 + $0x40] sm:$0xff] %v729
        %746 = vst [vmem:[#allocation2 + $0x48] sm:$0xff] %v730
        %747 = vst [vmem:[#allocation2 + $0x50] sm:$0xff] %v731
        %748 = vst [vmem:[#allocation2 + $0x58] sm:$0xff] %v732
        %749 = vst [vmem:[#allocation2 + $0x60] sm:$0xff] %v733
        %750 = vst [vmem:[#allocation2 + $0x68] sm:$0xff] %v734
        %751 = vst [vmem:[#allocation2 + $0x70] sm:$0xff] %v735
        %752 = vst [vmem:[#allocation2 + $0x78] sm:$0xff] %v736
        %p753 = scmp.eq.s32.totalorder %s25, 1
        // Predicated region
        $region94: #{gnn_forward.3} parent=84 // pred_check
          %p754 = pneg %p753
        $region95: #{gnn_forward.3} parent=84 // pred_check_branch
          %756 = sbr.rel (%p754) target = $region97
        $region96: #{gnn_forward.3} parent=84 // pred_region
          %v757 = vld [vmem:[#allocation2] sm:$0xff]
          %v758 = vld [vmem:[#allocation2 + $0x8] sm:$0xff]
          %v759 = vld [vmem:[#allocation2 + $0x10] sm:$0xff]
          %v760 = vld [vmem:[#allocation2 + $0x18] sm:$0xff]
          %v761 = vld [vmem:[#allocation2 + $0x20] sm:$0xff]
          %v762 = vld [vmem:[#allocation2 + $0x28] sm:$0xff]
          %v763 = vld [vmem:[#allocation2 + $0x30] sm:$0xff]
          %v764 = vld [vmem:[#allocation2 + $0x38] sm:$0xff]
          %v765 = vld [vmem:[#allocation2 + $0x40] sm:$0xff]
          %v766 = vld [vmem:[#allocation2 + $0x48] sm:$0xff]
          %v767 = vld [vmem:[#allocation2 + $0x50] sm:$0xff]
          %v768 = vld [vmem:[#allocation2 + $0x58] sm:$0xff]
          %v769 = vld [vmem:[#allocation2 + $0x60] sm:$0xff]
          %v770 = vld [vmem:[#allocation2 + $0x68] sm:$0xff]
          %v771 = vld [vmem:[#allocation2 + $0x70] sm:$0xff]
          %v772 = vld [vmem:[#allocation2 + $0x78] sm:$0xff]
          %v773 = vld [vmem:[%s482] sm:$0xff]
          %v774 = vld [vmem:[%s482 + $0x8] sm:$0xff]
          %v775 = vld [vmem:[%s482 + $0x10] sm:$0xff]
          %v776 = vld [vmem:[%s482 + $0x18] sm:$0xff]
          %v777 = vld [vmem:[%s482 + $0x20] sm:$0xff]
          %v778 = vld [vmem:[%s482 + $0x28] sm:$0xff]
          %v779 = vld [vmem:[%s482 + $0x30] sm:$0xff]
          %v780 = vld [vmem:[%s482 + $0x38] sm:$0xff]
          %v781 = vld [vmem:[%s482 + $0x40] sm:$0xff]
          %v782 = vld [vmem:[%s482 + $0x48] sm:$0xff]
          %v783 = vld [vmem:[%s482 + $0x50] sm:$0xff]
          %v784 = vld [vmem:[%s482 + $0x58] sm:$0xff]
          %v785 = vld [vmem:[%s482 + $0x60] sm:$0xff]
          %v786 = vld [vmem:[%s482 + $0x68] sm:$0xff]
          %v787 = vld [vmem:[%s482 + $0x70] sm:$0xff]
          %v788 = vld [vmem:[%s482 + $0x78] sm:$0xff]
          %790 = vset.pattern.permute.xlu0 0
          %791 = vperm.xlu0 %790, %v773
          %v792 = vpop.permute.xlu0 %791
          %795 = vset.pattern.permute.xlu0 0
          %796 = vperm.xlu0 %795, %v774
          %v797 = vpop.permute.xlu0 %796
          %800 = vset.pattern.permute.xlu0 0
          %801 = vperm.xlu0 %800, %v775
          %v802 = vpop.permute.xlu0 %801
          %805 = vset.pattern.permute.xlu0 0
          %806 = vperm.xlu0 %805, %v776
          %v807 = vpop.permute.xlu0 %806
          %810 = vset.pattern.permute.xlu0 0
          %811 = vperm.xlu0 %810, %v777
          %v812 = vpop.permute.xlu0 %811
          %815 = vset.pattern.permute.xlu0 0
          %816 = vperm.xlu0 %815, %v778
          %v817 = vpop.permute.xlu0 %816
          %820 = vset.pattern.permute.xlu0 0
          %821 = vperm.xlu0 %820, %v779
          %v822 = vpop.permute.xlu0 %821
          %825 = vset.pattern.permute.xlu0 0
          %826 = vperm.xlu0 %825, %v780
          %v827 = vpop.permute.xlu0 %826
          %830 = vset.pattern.permute.xlu0 0
          %831 = vperm.xlu0 %830, %v781
          %v832 = vpop.permute.xlu0 %831
          %835 = vset.pattern.permute.xlu0 0
          %836 = vperm.xlu0 %835, %v782
          %v837 = vpop.permute.xlu0 %836
          %840 = vset.pattern.permute.xlu0 0
          %841 = vperm.xlu0 %840, %v783
          %v842 = vpop.permute.xlu0 %841
          %845 = vset.pattern.permute.xlu0 0
          %846 = vperm.xlu0 %845, %v784
          %v847 = vpop.permute.xlu0 %846
          %850 = vset.pattern.permute.xlu0 0
          %851 = vperm.xlu0 %850, %v785
          %v852 = vpop.permute.xlu0 %851
          %855 = vset.pattern.permute.xlu0 0
          %856 = vperm.xlu0 %855, %v786
          %v857 = vpop.permute.xlu0 %856
          %860 = vset.pattern.permute.xlu0 0
          %861 = vperm.xlu0 %860, %v787
          %v862 = vpop.permute.xlu0 %861
          %865 = vset.pattern.permute.xlu0 0
          %866 = vperm.xlu0 %865, %v788
          %v867 = vpop.permute.xlu0 %866
          %v869 = vmul.f32 %v757, %v792
          %v870 = vmul.f32 %v758, %v797
          %v871 = vmul.f32 %v759, %v802
          %v872 = vmul.f32 %v760, %v807
          %v873 = vmul.f32 %v761, %v812
          %v874 = vmul.f32 %v762, %v817
          %v875 = vmul.f32 %v763, %v822
          %v876 = vmul.f32 %v764, %v827
          %v877 = vmul.f32 %v765, %v832
          %v878 = vmul.f32 %v766, %v837
          %v879 = vmul.f32 %v767, %v842
          %v880 = vmul.f32 %v768, %v847
          %v881 = vmul.f32 %v769, %v852
          %v882 = vmul.f32 %v770, %v857
          %v883 = vmul.f32 %v771, %v862
          %v884 = vmul.f32 %v772, %v867
          %v885 = vld [vmem:[%s494] sm:$0xf]
          %v886 = vld [vmem:[%s494 + $0x4] sm:$0xf]
          %v887 = vld [vmem:[%s494 + $0x8] sm:$0xf]
          %v888 = vld [vmem:[%s494 + $0xc] sm:$0xf]
          %v889 = vld [vmem:[%s494 + $0x10] sm:$0xf]
          %v890 = vld [vmem:[%s494 + $0x14] sm:$0xf]
          %v891 = vld [vmem:[%s494 + $0x18] sm:$0xf]
          %v892 = vld [vmem:[%s494 + $0x1c] sm:$0xf]
          %v893 = vld [vmem:[%s494 + $0x20] sm:$0xf]
          %v894 = vld [vmem:[%s494 + $0x24] sm:$0xf]
          %v895 = vld [vmem:[%s494 + $0x28] sm:$0xf]
          %v896 = vld [vmem:[%s494 + $0x2c] sm:$0xf]
          %v897 = vld [vmem:[%s494 + $0x30] sm:$0xf]
          %v898 = vld [vmem:[%s494 + $0x34] sm:$0xf]
          %v899 = vld [vmem:[%s494 + $0x38] sm:$0xf]
          %v900 = vld [vmem:[%s494 + $0x3c] sm:$0xf]
          %v901 = vunpack.c.l.bf16 %v885
          %v902 = vunpack.c.l.bf16 %v886
          %v903 = vunpack.c.l.bf16 %v887
          %v904 = vunpack.c.l.bf16 %v888
          %v905 = vunpack.c.l.bf16 %v889
          %v906 = vunpack.c.l.bf16 %v890
          %v907 = vunpack.c.l.bf16 %v891
          %v908 = vunpack.c.l.bf16 %v892
          %v909 = vunpack.c.l.bf16 %v893
          %v910 = vunpack.c.l.bf16 %v894
          %v911 = vunpack.c.l.bf16 %v895
          %v912 = vunpack.c.l.bf16 %v896
          %v913 = vunpack.c.l.bf16 %v897
          %v914 = vunpack.c.l.bf16 %v898
          %v915 = vunpack.c.l.bf16 %v899
          %v916 = vunpack.c.l.bf16 %v900
          %v917 = vld [vmem:[%s4] sm:$0xff]
          %v918 = vld [vmem:[%s4 + $0x8] sm:$0xff]
          %v919 = vld [vmem:[%s4 + $0x10] sm:$0xff]
          %v920 = vld [vmem:[%s4 + $0x18] sm:$0xff]
          %v921 = vld [vmem:[%s4 + $0x20] sm:$0xff]
          %v922 = vld [vmem:[%s4 + $0x28] sm:$0xff]
          %v923 = vld [vmem:[%s4 + $0x30] sm:$0xff]
          %v924 = vld [vmem:[%s4 + $0x38] sm:$0xff]
          %v925 = vld [vmem:[%s4 + $0x40] sm:$0xff]
          %v926 = vld [vmem:[%s4 + $0x48] sm:$0xff]
          %v927 = vld [vmem:[%s4 + $0x50] sm:$0xff]
          %v928 = vld [vmem:[%s4 + $0x58] sm:$0xff]
          %v929 = vld [vmem:[%s4 + $0x60] sm:$0xff]
          %v930 = vld [vmem:[%s4 + $0x68] sm:$0xff]
          %v931 = vld [vmem:[%s4 + $0x70] sm:$0xff]
          %v932 = vld [vmem:[%s4 + $0x78] sm:$0xff]
          %v933 = vld [vmem:[%s5] sm:$0xff]
          %v934 = vld [vmem:[%s5 + $0x8] sm:$0xff]
          %v935 = vld [vmem:[%s5 + $0x10] sm:$0xff]
          %v936 = vld [vmem:[%s5 + $0x18] sm:$0xff]
          %v937 = vld [vmem:[%s5 + $0x20] sm:$0xff]
          %v938 = vld [vmem:[%s5 + $0x28] sm:$0xff]
          %v939 = vld [vmem:[%s5 + $0x30] sm:$0xff]
          %v940 = vld [vmem:[%s5 + $0x38] sm:$0xff]
          %v941 = vld [vmem:[%s5 + $0x40] sm:$0xff]
          %v942 = vld [vmem:[%s5 + $0x48] sm:$0xff]
          %v943 = vld [vmem:[%s5 + $0x50] sm:$0xff]
          %v944 = vld [vmem:[%s5 + $0x58] sm:$0xff]
          %v945 = vld [vmem:[%s5 + $0x60] sm:$0xff]
          %v946 = vld [vmem:[%s5 + $0x68] sm:$0xff]
          %v947 = vld [vmem:[%s5 + $0x70] sm:$0xff]
          %v948 = vld [vmem:[%s5 + $0x78] sm:$0xff]
          %949 = vmatpush.msra.mxu0 %v948
          %950 = vmatpush.msra.mxu0 %v947
          %951 = vmatpush.msra.mxu0 %v946
          %952 = vmatpush.msra.mxu0 %v945
          %953 = vmatpush.msra.mxu0 %v944
          %954 = vmatpush.msra.mxu0 %v943
          %955 = vmatpush.msra.mxu0 %v942
          %956 = vmatpush.msra.mxu0 %v941
          %957 = vmatpush.msra.mxu0 %v940
          %958 = vmatpush.msra.mxu0 %v939
          %959 = vmatpush.msra.mxu0 %v938
          %960 = vmatpush.msra.mxu0 %v937
          %961 = vmatpush.msra.mxu0 %v936
          %962 = vmatpush.msra.mxu0 %v935
          %963 = vmatpush.msra.mxu0 %v934
          %964 = vmatpush.msra.mxu0 %v933
          %965 = vmatmul.f32.gmra.mxu0 %v901
          %v966 = vpop.f32.mrf.mxu0
          %v967 = vadd.f32 0.0, %v966
          %968 = vmatmul.f32.gmra.mxu0 %v902
          %v969 = vpop.f32.mrf.mxu0
          %v970 = vadd.f32 0.0, %v969
          %971 = vmatmul.f32.gmra.mxu0 %v903
          %v972 = vpop.f32.mrf.mxu0
          %v973 = vadd.f32 0.0, %v972
          %974 = vmatmul.f32.gmra.mxu0 %v904
          %v975 = vpop.f32.mrf.mxu0
          %v976 = vadd.f32 0.0, %v975
          %977 = vmatmul.f32.gmra.mxu0 %v905
          %v978 = vpop.f32.mrf.mxu0
          %v979 = vadd.f32 0.0, %v978
          %980 = vmatmul.f32.gmra.mxu0 %v906
          %v981 = vpop.f32.mrf.mxu0
          %v982 = vadd.f32 0.0, %v981
          %983 = vmatmul.f32.gmra.mxu0 %v907
          %v984 = vpop.f32.mrf.mxu0
          %v985 = vadd.f32 0.0, %v984
          %986 = vmatmul.f32.gmra.mxu0 %v908
          %v987 = vpop.f32.mrf.mxu0
          %v988 = vadd.f32 0.0, %v987
          %989 = vmatmul.f32.gmra.mxu0 %v909
          %v990 = vpop.f32.mrf.mxu0
          %v991 = vadd.f32 0.0, %v990
          %992 = vmatmul.f32.gmra.mxu0 %v910
          %v993 = vpop.f32.mrf.mxu0
          %v994 = vadd.f32 0.0, %v993
          %995 = vmatmul.f32.gmra.mxu0 %v911
          %v996 = vpop.f32.mrf.mxu0
          %v997 = vadd.f32 0.0, %v996
          %998 = vmatmul.f32.gmra.mxu0 %v912
          %v999 = vpop.f32.mrf.mxu0
          %v1000 = vadd.f32 0.0, %v999
          %1001 = vmatmul.f32.gmra.mxu0 %v913
          %v1002 = vpop.f32.mrf.mxu0
          %v1003 = vadd.f32 0.0, %v1002
          %1004 = vmatmul.f32.gmra.mxu0 %v914
          %v1005 = vpop.f32.mrf.mxu0
          %v1006 = vadd.f32 0.0, %v1005
          %1007 = vmatmul.f32.gmra.mxu0 %v915
          %v1008 = vpop.f32.mrf.mxu0
          %v1009 = vadd.f32 0.0, %v1008
          %1010 = vmatmul.f32.gmra.mxu0 %v916
          %v1011 = vpop.f32.mrf.mxu0
          %v1012 = vadd.f32 0.0, %v1011
          %1013 = vdwg.mxu0
          %1014 = vmatpush.msra.mxu0 %v932
          %1015 = vmatpush.msra.mxu0 %v931
          %1016 = vmatpush.msra.mxu0 %v930
          %1017 = vmatpush.msra.mxu0 %v929
          %1018 = vmatpush.msra.mxu0 %v928
          %1019 = vmatpush.msra.mxu0 %v927
          %1020 = vmatpush.msra.mxu0 %v926
          %1021 = vmatpush.msra.mxu0 %v925
          %1022 = vmatpush.msra.mxu0 %v924
          %1023 = vmatpush.msra.mxu0 %v923
          %1024 = vmatpush.msra.mxu0 %v922
          %1025 = vmatpush.msra.mxu0 %v921
          %1026 = vmatpush.msra.mxu0 %v920
          %1027 = vmatpush.msra.mxu0 %v919
          %1028 = vmatpush.msra.mxu0 %v918
          %1029 = vmatpush.msra.mxu0 %v917
          %1030 = vmatmul.f32.gmra.mxu0 %v869
          %v1031 = vpop.f32.mrf.mxu0
          %v1032 = vadd.f32 %v967, %v1031
          %1033 = vmatmul.f32.gmra.mxu0 %v870
          %v1034 = vpop.f32.mrf.mxu0
          %v1035 = vadd.f32 %v970, %v1034
          %1036 = vmatmul.f32.gmra.mxu0 %v871
          %v1037 = vpop.f32.mrf.mxu0
          %v1038 = vadd.f32 %v973, %v1037
          %1039 = vmatmul.f32.gmra.mxu0 %v872
          %v1040 = vpop.f32.mrf.mxu0
          %v1041 = vadd.f32 %v976, %v1040
          %1042 = vmatmul.f32.gmra.mxu0 %v873
          %v1043 = vpop.f32.mrf.mxu0
          %v1044 = vadd.f32 %v979, %v1043
          %1045 = vmatmul.f32.gmra.mxu0 %v874
          %v1046 = vpop.f32.mrf.mxu0
          %v1047 = vadd.f32 %v982, %v1046
          %1048 = vmatmul.f32.gmra.mxu0 %v875
          %v1049 = vpop.f32.mrf.mxu0
          %v1050 = vadd.f32 %v985, %v1049
          %1051 = vmatmul.f32.gmra.mxu0 %v876
          %v1052 = vpop.f32.mrf.mxu0
          %v1053 = vadd.f32 %v988, %v1052
          %1054 = vmatmul.f32.gmra.mxu0 %v877
          %v1055 = vpop.f32.mrf.mxu0
          %v1056 = vadd.f32 %v991, %v1055
          %1057 = vmatmul.f32.gmra.mxu0 %v878
          %v1058 = vpop.f32.mrf.mxu0
          %v1059 = vadd.f32 %v994, %v1058
          %1060 = vmatmul.f32.gmra.mxu0 %v879
          %v1061 = vpop.f32.mrf.mxu0
          %v1062 = vadd.f32 %v997, %v1061
          %1063 = vmatmul.f32.gmra.mxu0 %v880
          %v1064 = vpop.f32.mrf.mxu0
          %v1065 = vadd.f32 %v1000, %v1064
          %1066 = vmatmul.f32.gmra.mxu0 %v881
          %v1067 = vpop.f32.mrf.mxu0
          %v1068 = vadd.f32 %v1003, %v1067
          %1069 = vmatmul.f32.gmra.mxu0 %v882
          %v1070 = vpop.f32.mrf.mxu0
          %v1071 = vadd.f32 %v1006, %v1070
          %1072 = vmatmul.f32.gmra.mxu0 %v883
          %v1073 = vpop.f32.mrf.mxu0
          %v1074 = vadd.f32 %v1009, %v1073
          %1075 = vmatmul.f32.gmra.mxu0 %v884
          %v1076 = vpop.f32.mrf.mxu0
          %v1077 = vadd.f32 %v1012, %v1076
          %1078 = vdwg.mxu0
          %v1079 = vld [vmem:[%s6] sm:$0x1]
          %v1081 = vperm.slane %v1079, 0
          %v1083 = vadd.f32 %v1032, %v1081
          %v1084 = vadd.f32 %v1035, %v1081
          %v1085 = vadd.f32 %v1038, %v1081
          %v1086 = vadd.f32 %v1041, %v1081
          %v1087 = vadd.f32 %v1044, %v1081
          %v1088 = vadd.f32 %v1047, %v1081
          %v1089 = vadd.f32 %v1050, %v1081
          %v1090 = vadd.f32 %v1053, %v1081
          %v1091 = vadd.f32 %v1056, %v1081
          %v1092 = vadd.f32 %v1059, %v1081
          %v1093 = vadd.f32 %v1062, %v1081
          %v1094 = vadd.f32 %v1065, %v1081
          %v1095 = vadd.f32 %v1068, %v1081
          %v1096 = vadd.f32 %v1071, %v1081
          %v1097 = vadd.f32 %v1074, %v1081
          %v1098 = vadd.f32 %v1077, %v1081
          %1099 = vst [vmem:[%s506] sm:$0xff] %v1083
          %1100 = vst [vmem:[%s506 + $0x8] sm:$0xff] %v1084
          %1101 = vst [vmem:[%s506 + $0x10] sm:$0xff] %v1085
          %1102 = vst [vmem:[%s506 + $0x18] sm:$0xff] %v1086
          %1103 = vst [vmem:[%s506 + $0x20] sm:$0xff] %v1087
          %1104 = vst [vmem:[%s506 + $0x28] sm:$0xff] %v1088
          %1105 = vst [vmem:[%s506 + $0x30] sm:$0xff] %v1089
          %1106 = vst [vmem:[%s506 + $0x38] sm:$0xff] %v1090
          %1107 = vst [vmem:[%s506 + $0x40] sm:$0xff] %v1091
          %1108 = vst [vmem:[%s506 + $0x48] sm:$0xff] %v1092
          %1109 = vst [vmem:[%s506 + $0x50] sm:$0xff] %v1093
          %1110 = vst [vmem:[%s506 + $0x58] sm:$0xff] %v1094
          %1111 = vst [vmem:[%s506 + $0x60] sm:$0xff] %v1095
          %1112 = vst [vmem:[%s506 + $0x68] sm:$0xff] %v1096
          %1113 = vst [vmem:[%s506 + $0x70] sm:$0xff] %v1097
          %1114 = vst [vmem:[%s506 + $0x78] sm:$0xff] %v1098
          %v1115 = vlaneseq
          %v1116 = vand.u32 %v1115, 127
          %vm1117 = vcmp.lt.s32.totalorder %v1116, 4
          %v1118 = vsel %vm1117, %v1083, -1e+30
          %v1119 = vsel %vm1117, %v1084, -1e+30
          %v1120 = vsel %vm1117, %v1085, -1e+30
          %v1121 = vsel %vm1117, %v1086, -1e+30
          %v1122 = vsel %vm1117, %v1087, -1e+30
          %v1123 = vsel %vm1117, %v1088, -1e+30
          %v1124 = vsel %vm1117, %v1089, -1e+30
          %v1125 = vsel %vm1117, %v1090, -1e+30
          %v1126 = vsel %vm1117, %v1091, -1e+30
          %v1127 = vsel %vm1117, %v1092, -1e+30
          %v1128 = vsel %vm1117, %v1093, -1e+30
          %v1129 = vsel %vm1117, %v1094, -1e+30
          %v1130 = vsel %vm1117, %v1095, -1e+30
          %v1131 = vsel %vm1117, %v1096, -1e+30
          %v1132 = vsel %vm1117, %v1097, -1e+30
          %v1133 = vsel %vm1117, %v1098, -1e+30
          %1134 = vmax.xlane.f32.xlu0 %v1118
          %v1135 = vpop.xlane.xlu0 %1134
          %1136 = vmax.xlane.f32.xlu0 %v1119
          %v1137 = vpop.xlane.xlu0 %1136
          %1138 = vmax.xlane.f32.xlu0 %v1120
          %v1139 = vpop.xlane.xlu0 %1138
          %1140 = vmax.xlane.f32.xlu0 %v1121
          %v1141 = vpop.xlane.xlu0 %1140
          %1142 = vmax.xlane.f32.xlu0 %v1122
          %v1143 = vpop.xlane.xlu0 %1142
          %1144 = vmax.xlane.f32.xlu0 %v1123
          %v1145 = vpop.xlane.xlu0 %1144
          %1146 = vmax.xlane.f32.xlu0 %v1124
          %v1147 = vpop.xlane.xlu0 %1146
          %1148 = vmax.xlane.f32.xlu0 %v1125
          %v1149 = vpop.xlane.xlu0 %1148
          %1150 = vmax.xlane.f32.xlu0 %v1126
          %v1151 = vpop.xlane.xlu0 %1150
          %1152 = vmax.xlane.f32.xlu0 %v1127
          %v1153 = vpop.xlane.xlu0 %1152
          %1154 = vmax.xlane.f32.xlu0 %v1128
          %v1155 = vpop.xlane.xlu0 %1154
          %1156 = vmax.xlane.f32.xlu0 %v1129
          %v1157 = vpop.xlane.xlu0 %1156
          %1158 = vmax.xlane.f32.xlu0 %v1130
          %v1159 = vpop.xlane.xlu0 %1158
          %1160 = vmax.xlane.f32.xlu0 %v1131
          %v1161 = vpop.xlane.xlu0 %1160
          %1162 = vmax.xlane.f32.xlu0 %v1132
          %v1163 = vpop.xlane.xlu0 %1162
          %1164 = vmax.xlane.f32.xlu0 %v1133
          %v1165 = vpop.xlane.xlu0 %1164
          %v1166 = vsub.f32 %v1118, %v1135
          %v1167 = vsub.f32 %v1119, %v1137
          %v1168 = vsub.f32 %v1120, %v1139
          %v1169 = vsub.f32 %v1121, %v1141
          %v1170 = vsub.f32 %v1122, %v1143
          %v1171 = vsub.f32 %v1123, %v1145
          %v1172 = vsub.f32 %v1124, %v1147
          %v1173 = vsub.f32 %v1125, %v1149
          %v1174 = vsub.f32 %v1126, %v1151
          %v1175 = vsub.f32 %v1127, %v1153
          %v1176 = vsub.f32 %v1128, %v1155
          %v1177 = vsub.f32 %v1129, %v1157
          %v1178 = vsub.f32 %v1130, %v1159
          %v1179 = vsub.f32 %v1131, %v1161
          %v1180 = vsub.f32 %v1132, %v1163
          %v1181 = vsub.f32 %v1133, %v1165
          %v1182 = vmul.f32 %v1166, 1.442695
          %v1183 = vpow.pop %v1182
          %v1184 = vmul.f32 %v1167, 1.442695
          %v1185 = vpow.pop %v1184
          %v1186 = vmul.f32 %v1168, 1.442695
          %v1187 = vpow.pop %v1186
          %v1188 = vmul.f32 %v1169, 1.442695
          %v1189 = vpow.pop %v1188
          %v1190 = vmul.f32 %v1170, 1.442695
          %v1191 = vpow.pop %v1190
          %v1192 = vmul.f32 %v1171, 1.442695
          %v1193 = vpow.pop %v1192
          %v1194 = vmul.f32 %v1172, 1.442695
          %v1195 = vpow.pop %v1194
          %v1196 = vmul.f32 %v1173, 1.442695
          %v1197 = vpow.pop %v1196
          %v1198 = vmul.f32 %v1174, 1.442695
          %v1199 = vpow.pop %v1198
          %v1200 = vmul.f32 %v1175, 1.442695
          %v1201 = vpow.pop %v1200
          %v1202 = vmul.f32 %v1176, 1.442695
          %v1203 = vpow.pop %v1202
          %v1204 = vmul.f32 %v1177, 1.442695
          %v1205 = vpow.pop %v1204
          %v1206 = vmul.f32 %v1178, 1.442695
          %v1207 = vpow.pop %v1206
          %v1208 = vmul.f32 %v1179, 1.442695
          %v1209 = vpow.pop %v1208
          %v1210 = vmul.f32 %v1180, 1.442695
          %v1211 = vpow.pop %v1210
          %v1212 = vmul.f32 %v1181, 1.442695
          %v1213 = vpow.pop %v1212
          %v1214 = vsel %vm1117, %v1183, 0.0
          %v1215 = vsel %vm1117, %v1185, 0.0
          %v1216 = vsel %vm1117, %v1187, 0.0
          %v1217 = vsel %vm1117, %v1189, 0.0
          %v1218 = vsel %vm1117, %v1191, 0.0
          %v1219 = vsel %vm1117, %v1193, 0.0
          %v1220 = vsel %vm1117, %v1195, 0.0
          %v1221 = vsel %vm1117, %v1197, 0.0
          %v1222 = vsel %vm1117, %v1199, 0.0
          %v1223 = vsel %vm1117, %v1201, 0.0
          %v1224 = vsel %vm1117, %v1203, 0.0
          %v1225 = vsel %vm1117, %v1205, 0.0
          %v1226 = vsel %vm1117, %v1207, 0.0
          %v1227 = vsel %vm1117, %v1209, 0.0
          %v1228 = vsel %vm1117, %v1211, 0.0
          %v1229 = vsel %vm1117, %v1213, 0.0
          %1230 = vadd.xlane.f32.xlu0 %v1214
          %v1231 = vpop.xlane.xlu0 %1230
          %1232 = vadd.xlane.f32.xlu0 %v1215
          %v1233 = vpop.xlane.xlu0 %1232
          %1234 = vadd.xlane.f32.xlu0 %v1216
          %v1235 = vpop.xlane.xlu0 %1234
          %1236 = vadd.xlane.f32.xlu0 %v1217
          %v1237 = vpop.xlane.xlu0 %1236
          %1238 = vadd.xlane.f32.xlu0 %v1218
          %v1239 = vpop.xlane.xlu0 %1238
          %1240 = vadd.xlane.f32.xlu0 %v1219
          %v1241 = vpop.xlane.xlu0 %1240
          %1242 = vadd.xlane.f32.xlu0 %v1220
          %v1243 = vpop.xlane.xlu0 %1242
          %1244 = vadd.xlane.f32.xlu0 %v1221
          %v1245 = vpop.xlane.xlu0 %1244
          %1246 = vadd.xlane.f32.xlu0 %v1222
          %v1247 = vpop.xlane.xlu0 %1246
          %1248 = vadd.xlane.f32.xlu0 %v1223
          %v1249 = vpop.xlane.xlu0 %1248
          %1250 = vadd.xlane.f32.xlu0 %v1224
          %v1251 = vpop.xlane.xlu0 %1250
          %1252 = vadd.xlane.f32.xlu0 %v1225
          %v1253 = vpop.xlane.xlu0 %1252
          %1254 = vadd.xlane.f32.xlu0 %v1226
          %v1255 = vpop.xlane.xlu0 %1254
          %1256 = vadd.xlane.f32.xlu0 %v1227
          %v1257 = vpop.xlane.xlu0 %1256
          %1258 = vadd.xlane.f32.xlu0 %v1228
          %v1259 = vpop.xlane.xlu0 %1258
          %1260 = vadd.xlane.f32.xlu0 %v1229
          %v1261 = vpop.xlane.xlu0 %1260
          %v1262 = vrcp.pop %v1231
          %v1263 = vmul.f32 %v1231, %v1262
          %v1264 = vsub.f32 1.0, %v1263
          %v1265 = vmul.f32 %v1262, %v1264
          %v1266 = vadd.f32 %v1262, %v1265
          %vm1267 = vweird.f32 %v1231
          %vm1268 = vweird.f32 %v1262
          %vm1269 = vmor %vm1267, %vm1268
          %v1270 = vsel %vm1269, %v1262, %v1266
          %v1271 = vand.u32 2147483647, %v1231
          %vm1272 = vcmp.eq.f32.partialorder %v1271, 8.507059e+37
          %v1273 = vand.u32 %v1231, 2147483648
          %v1274 = vor.u32 1.1754944e-38, %v1273
          %v1275 = vsel %vm1272, %v1274, %v1270
          %v1276 = vmul.f32 %v1214, %v1275
          %v1277 = vrcp.pop %v1233
          %v1278 = vmul.f32 %v1233, %v1277
          %v1279 = vsub.f32 1.0, %v1278
          %v1280 = vmul.f32 %v1277, %v1279
          %v1281 = vadd.f32 %v1277, %v1280
          %vm1282 = vweird.f32 %v1233
          %vm1283 = vweird.f32 %v1277
          %vm1284 = vmor %vm1282, %vm1283
          %v1285 = vsel %vm1284, %v1277, %v1281
          %v1286 = vand.u32 2147483647, %v1233
          %vm1287 = vcmp.eq.f32.partialorder %v1286, 8.507059e+37
          %v1288 = vand.u32 %v1233, 2147483648
          %v1289 = vor.u32 1.1754944e-38, %v1288
          %v1290 = vsel %vm1287, %v1289, %v1285
          %v1291 = vmul.f32 %v1215, %v1290
          %v1292 = vrcp.pop %v1235
          %v1293 = vmul.f32 %v1235, %v1292
          %v1294 = vsub.f32 1.0, %v1293
          %v1295 = vmul.f32 %v1292, %v1294
          %v1296 = vadd.f32 %v1292, %v1295
          %vm1297 = vweird.f32 %v1235
          %vm1298 = vweird.f32 %v1292
          %vm1299 = vmor %vm1297, %vm1298
          %v1300 = vsel %vm1299, %v1292, %v1296
          %v1301 = vand.u32 2147483647, %v1235
          %vm1302 = vcmp.eq.f32.partialorder %v1301, 8.507059e+37
          %v1303 = vand.u32 %v1235, 2147483648
          %v1304 = vor.u32 1.1754944e-38, %v1303
          %v1305 = vsel %vm1302, %v1304, %v1300
          %v1306 = vmul.f32 %v1216, %v1305
          %v1307 = vrcp.pop %v1237
          %v1308 = vmul.f32 %v1237, %v1307
          %v1309 = vsub.f32 1.0, %v1308
          %v1310 = vmul.f32 %v1307, %v1309
          %v1311 = vadd.f32 %v1307, %v1310
          %vm1312 = vweird.f32 %v1237
          %vm1313 = vweird.f32 %v1307
          %vm1314 = vmor %vm1312, %vm1313
          %v1315 = vsel %vm1314, %v1307, %v1311
          %v1316 = vand.u32 2147483647, %v1237
          %vm1317 = vcmp.eq.f32.partialorder %v1316, 8.507059e+37
          %v1318 = vand.u32 %v1237, 2147483648
          %v1319 = vor.u32 1.1754944e-38, %v1318
          %v1320 = vsel %vm1317, %v1319, %v1315
          %v1321 = vmul.f32 %v1217, %v1320
          %v1322 = vrcp.pop %v1239
          %v1323 = vmul.f32 %v1239, %v1322
          %v1324 = vsub.f32 1.0, %v1323
          %v1325 = vmul.f32 %v1322, %v1324
          %v1326 = vadd.f32 %v1322, %v1325
          %vm1327 = vweird.f32 %v1239
          %vm1328 = vweird.f32 %v1322
          %vm1329 = vmor %vm1327, %vm1328
          %v1330 = vsel %vm1329, %v1322, %v1326
          %v1331 = vand.u32 2147483647, %v1239
          %vm1332 = vcmp.eq.f32.partialorder %v1331, 8.507059e+37
          %v1333 = vand.u32 %v1239, 2147483648
          %v1334 = vor.u32 1.1754944e-38, %v1333
          %v1335 = vsel %vm1332, %v1334, %v1330
          %v1336 = vmul.f32 %v1218, %v1335
          %v1337 = vrcp.pop %v1241
          %v1338 = vmul.f32 %v1241, %v1337
          %v1339 = vsub.f32 1.0, %v1338
          %v1340 = vmul.f32 %v1337, %v1339
          %v1341 = vadd.f32 %v1337, %v1340
          %vm1342 = vweird.f32 %v1241
          %vm1343 = vweird.f32 %v1337
          %vm1344 = vmor %vm1342, %vm1343
          %v1345 = vsel %vm1344, %v1337, %v1341
          %v1346 = vand.u32 2147483647, %v1241
          %vm1347 = vcmp.eq.f32.partialorder %v1346, 8.507059e+37
          %v1348 = vand.u32 %v1241, 2147483648
          %v1349 = vor.u32 1.1754944e-38, %v1348
          %v1350 = vsel %vm1347, %v1349, %v1345
          %v1351 = vmul.f32 %v1219, %v1350
          %v1352 = vrcp.pop %v1243
          %v1353 = vmul.f32 %v1243, %v1352
          %v1354 = vsub.f32 1.0, %v1353
          %v1355 = vmul.f32 %v1352, %v1354
          %v1356 = vadd.f32 %v1352, %v1355
          %vm1357 = vweird.f32 %v1243
          %vm1358 = vweird.f32 %v1352
          %vm1359 = vmor %vm1357, %vm1358
          %v1360 = vsel %vm1359, %v1352, %v1356
          %v1361 = vand.u32 2147483647, %v1243
          %vm1362 = vcmp.eq.f32.partialorder %v1361, 8.507059e+37
          %v1363 = vand.u32 %v1243, 2147483648
          %v1364 = vor.u32 1.1754944e-38, %v1363
          %v1365 = vsel %vm1362, %v1364, %v1360
          %v1366 = vmul.f32 %v1220, %v1365
          %v1367 = vrcp.pop %v1245
          %v1368 = vmul.f32 %v1245, %v1367
          %v1369 = vsub.f32 1.0, %v1368
          %v1370 = vmul.f32 %v1367, %v1369
          %v1371 = vadd.f32 %v1367, %v1370
          %vm1372 = vweird.f32 %v1245
          %vm1373 = vweird.f32 %v1367
          %vm1374 = vmor %vm1372, %vm1373
          %v1375 = vsel %vm1374, %v1367, %v1371
          %v1376 = vand.u32 2147483647, %v1245
          %vm1377 = vcmp.eq.f32.partialorder %v1376, 8.507059e+37
          %v1378 = vand.u32 %v1245, 2147483648
          %v1379 = vor.u32 1.1754944e-38, %v1378
          %v1380 = vsel %vm1377, %v1379, %v1375
          %v1381 = vmul.f32 %v1221, %v1380
          %v1382 = vrcp.pop %v1247
          %v1383 = vmul.f32 %v1247, %v1382
          %v1384 = vsub.f32 1.0, %v1383
          %v1385 = vmul.f32 %v1382, %v1384
          %v1386 = vadd.f32 %v1382, %v1385
          %vm1387 = vweird.f32 %v1247
          %vm1388 = vweird.f32 %v1382
          %vm1389 = vmor %vm1387, %vm1388
          %v1390 = vsel %vm1389, %v1382, %v1386
          %v1391 = vand.u32 2147483647, %v1247
          %vm1392 = vcmp.eq.f32.partialorder %v1391, 8.507059e+37
          %v1393 = vand.u32 %v1247, 2147483648
          %v1394 = vor.u32 1.1754944e-38, %v1393
          %v1395 = vsel %vm1392, %v1394, %v1390
          %v1396 = vmul.f32 %v1222, %v1395
          %v1397 = vrcp.pop %v1249
          %v1398 = vmul.f32 %v1249, %v1397
          %v1399 = vsub.f32 1.0, %v1398
          %v1400 = vmul.f32 %v1397, %v1399
          %v1401 = vadd.f32 %v1397, %v1400
          %vm1402 = vweird.f32 %v1249
          %vm1403 = vweird.f32 %v1397
          %vm1404 = vmor %vm1402, %vm1403
          %v1405 = vsel %vm1404, %v1397, %v1401
          %v1406 = vand.u32 2147483647, %v1249
          %vm1407 = vcmp.eq.f32.partialorder %v1406, 8.507059e+37
          %v1408 = vand.u32 %v1249, 2147483648
          %v1409 = vor.u32 1.1754944e-38, %v1408
          %v1410 = vsel %vm1407, %v1409, %v1405
          %v1411 = vmul.f32 %v1223, %v1410
          %v1412 = vrcp.pop %v1251
          %v1413 = vmul.f32 %v1251, %v1412
          %v1414 = vsub.f32 1.0, %v1413
          %v1415 = vmul.f32 %v1412, %v1414
          %v1416 = vadd.f32 %v1412, %v1415
          %vm1417 = vweird.f32 %v1251
          %vm1418 = vweird.f32 %v1412
          %vm1419 = vmor %vm1417, %vm1418
          %v1420 = vsel %vm1419, %v1412, %v1416
          %v1421 = vand.u32 2147483647, %v1251
          %vm1422 = vcmp.eq.f32.partialorder %v1421, 8.507059e+37
          %v1423 = vand.u32 %v1251, 2147483648
          %v1424 = vor.u32 1.1754944e-38, %v1423
          %v1425 = vsel %vm1422, %v1424, %v1420
          %v1426 = vmul.f32 %v1224, %v1425
          %v1427 = vrcp.pop %v1253
          %v1428 = vmul.f32 %v1253, %v1427
          %v1429 = vsub.f32 1.0, %v1428
          %v1430 = vmul.f32 %v1427, %v1429
          %v1431 = vadd.f32 %v1427, %v1430
          %vm1432 = vweird.f32 %v1253
          %vm1433 = vweird.f32 %v1427
          %vm1434 = vmor %vm1432, %vm1433
          %v1435 = vsel %vm1434, %v1427, %v1431
          %v1436 = vand.u32 2147483647, %v1253
          %vm1437 = vcmp.eq.f32.partialorder %v1436, 8.507059e+37
          %v1438 = vand.u32 %v1253, 2147483648
          %v1439 = vor.u32 1.1754944e-38, %v1438
          %v1440 = vsel %vm1437, %v1439, %v1435
          %v1441 = vmul.f32 %v1225, %v1440
          %v1442 = vrcp.pop %v1255
          %v1443 = vmul.f32 %v1255, %v1442
          %v1444 = vsub.f32 1.0, %v1443
          %v1445 = vmul.f32 %v1442, %v1444
          %v1446 = vadd.f32 %v1442, %v1445
          %vm1447 = vweird.f32 %v1255
          %vm1448 = vweird.f32 %v1442
          %vm1449 = vmor %vm1447, %vm1448
          %v1450 = vsel %vm1449, %v1442, %v1446
          %v1451 = vand.u32 2147483647, %v1255
          %vm1452 = vcmp.eq.f32.partialorder %v1451, 8.507059e+37
          %v1453 = vand.u32 %v1255, 2147483648
          %v1454 = vor.u32 1.1754944e-38, %v1453
          %v1455 = vsel %vm1452, %v1454, %v1450
          %v1456 = vmul.f32 %v1226, %v1455
          %v1457 = vrcp.pop %v1257
          %v1458 = vmul.f32 %v1257, %v1457
          %v1459 = vsub.f32 1.0, %v1458
          %v1460 = vmul.f32 %v1457, %v1459
          %v1461 = vadd.f32 %v1457, %v1460
          %vm1462 = vweird.f32 %v1257
          %vm1463 = vweird.f32 %v1457
          %vm1464 = vmor %vm1462, %vm1463
          %v1465 = vsel %vm1464, %v1457, %v1461
          %v1466 = vand.u32 2147483647, %v1257
          %vm1467 = vcmp.eq.f32.partialorder %v1466, 8.507059e+37
          %v1468 = vand.u32 %v1257, 2147483648
          %v1469 = vor.u32 1.1754944e-38, %v1468
          %v1470 = vsel %vm1467, %v1469, %v1465
          %v1471 = vmul.f32 %v1227, %v1470
          %v1472 = vrcp.pop %v1259
          %v1473 = vmul.f32 %v1259, %v1472
          %v1474 = vsub.f32 1.0, %v1473
          %v1475 = vmul.f32 %v1472, %v1474
          %v1476 = vadd.f32 %v1472, %v1475
          %vm1477 = vweird.f32 %v1259
          %vm1478 = vweird.f32 %v1472
          %vm1479 = vmor %vm1477, %vm1478
          %v1480 = vsel %vm1479, %v1472, %v1476
          %v1481 = vand.u32 2147483647, %v1259
          %vm1482 = vcmp.eq.f32.partialorder %v1481, 8.507059e+37
          %v1483 = vand.u32 %v1259, 2147483648
          %v1484 = vor.u32 1.1754944e-38, %v1483
          %v1485 = vsel %vm1482, %v1484, %v1480
          %v1486 = vmul.f32 %v1228, %v1485
          %v1487 = vrcp.pop %v1261
          %v1488 = vmul.f32 %v1261, %v1487
          %v1489 = vsub.f32 1.0, %v1488
          %v1490 = vmul.f32 %v1487, %v1489
          %v1491 = vadd.f32 %v1487, %v1490
          %vm1492 = vweird.f32 %v1261
          %vm1493 = vweird.f32 %v1487
          %vm1494 = vmor %vm1492, %vm1493
          %v1495 = vsel %vm1494, %v1487, %v1491
          %v1496 = vand.u32 2147483647, %v1261
          %vm1497 = vcmp.eq.f32.partialorder %v1496, 8.507059e+37
          %v1498 = vand.u32 %v1261, 2147483648
          %v1499 = vor.u32 1.1754944e-38, %v1498
          %v1500 = vsel %vm1497, %v1499, %v1495
          %v1501 = vmul.f32 %v1229, %v1500
          %1502 = vst [vmem:[%s500] sm:$0xff] %v1276
          %1503 = vst [vmem:[%s500 + $0x8] sm:$0xff] %v1291
          %1504 = vst [vmem:[%s500 + $0x10] sm:$0xff] %v1306
          %1505 = vst [vmem:[%s500 + $0x18] sm:$0xff] %v1321
          %1506 = vst [vmem:[%s500 + $0x20] sm:$0xff] %v1336
          %1507 = vst [vmem:[%s500 + $0x28] sm:$0xff] %v1351
          %1508 = vst [vmem:[%s500 + $0x30] sm:$0xff] %v1366
          %1509 = vst [vmem:[%s500 + $0x38] sm:$0xff] %v1381
          %1510 = vst [vmem:[%s500 + $0x40] sm:$0xff] %v1396
          %1511 = vst [vmem:[%s500 + $0x48] sm:$0xff] %v1411
          %1512 = vst [vmem:[%s500 + $0x50] sm:$0xff] %v1426
          %1513 = vst [vmem:[%s500 + $0x58] sm:$0xff] %v1441
          %1514 = vst [vmem:[%s500 + $0x60] sm:$0xff] %v1456
          %1515 = vst [vmem:[%s500 + $0x68] sm:$0xff] %v1471
          %1516 = vst [vmem:[%s500 + $0x70] sm:$0xff] %v1486
          %1517 = vst [vmem:[%s500 + $0x78] sm:$0xff] %v1501
        $region97: #{gnn_forward.3} parent=84 // pred_fallthru
          _
        %s1518 = smul.u32 16, %s24
        %p1519 = scmp.lt.s32.totalorder %s1518, 31
        %s1520 = scalar_select %p1519, %s1518, 31
        %s1521 = smul.addr %s1520, 8
        %s1522 = scalar_lea.vmem %s7, %s1521
        %s1523 = smul.u32 16, %s24
        %p1524 = scmp.lt.s32.totalorder %s1523, 31
        %s1525 = scalar_select %p1524, %s1523, 31
        %s1526 = smul.addr %s1525, 8
        %s1527 = scalar_lea.vmem %s8, %s1526
        // Predicated region
        $region98: #{gnn_forward.3} parent=84 // pred_check
          %p1528 = pneg %p219
        $region99: #{gnn_forward.3} parent=84 // pred_check_branch
          %1530 = sbr.rel (%p1528) target = $region101
        $region100: #{gnn_forward.3} parent=84 // pred_region
          %s1531 = smul.u32 16, %s24
        $region101: #{gnn_forward.3} parent=84 // pred_fallthru
          _
        // Predicated region
        $region102: #{gnn_forward.3} parent=84 // pred_check
          %p1532 = pneg %p245
        $region103: #{gnn_forward.3} parent=84 // pred_check_branch
          %1534 = sbr.rel (%p1532) target = $region105
        $region104: #{gnn_forward.3} parent=84 // pred_region
          %s1535 = smul.u32 16, %s24
        $region105: #{gnn_forward.3} parent=84 // pred_fallthru
          _
      $region85: #{gnn_forward.3} parent=5 // pred_fallthru
        _
      %p1536 = scmp.le.s32.totalorder 2, %s15
      // Predicated region
      $region106: #{gnn_forward.3} parent=5 // pred_check
        %p1537 = pneg %p1536
      $region107: #{gnn_forward.3} parent=5 // pred_check_branch
        %1539 = sbr.rel (%p1537) target = $region109
      $region108: #{gnn_forward.3} parent=5 // pred_region
        %s1540 = ssub.s32 %s15, 2
        // Predicated region
        $region110: #{gnn_forward.3} parent=108 // pred_check
          %p1541 = pneg %p225
        $region111: #{gnn_forward.3} parent=108 // pred_check_branch
          %1543 = sbr.rel (%p1541) target = $region113
        $region112: #{gnn_forward.3} parent=108 // pred_region
          %s1544 = smul.u32 16, %s26
          %p1545 = scmp.lt.s32.totalorder %s1544, 31
          %s1546 = scalar_select %p1545, %s1544, 31
          %s1547 = smul.addr %s1546, 8
          %s1548 = scalar_lea.vmem %s7, %s1547
        $region113: #{gnn_forward.3} parent=108 // pred_fallthru
          _
        // Predicated region
        $region114: #{gnn_forward.3} parent=108 // pred_check
          %p1549 = pneg %p251
        $region115: #{gnn_forward.3} parent=108 // pred_check_branch
          %1551 = sbr.rel (%p1549) target = $region117
        $region116: #{gnn_forward.3} parent=108 // pred_region
          %s1552 = smul.u32 16, %s26
          %p1553 = scmp.lt.s32.totalorder %s1552, 31
          %s1554 = scalar_select %p1553, %s1552, 31
          %s1555 = smul.addr %s1554, 8
          %s1556 = scalar_lea.vmem %s8, %s1555
        $region117: #{gnn_forward.3} parent=108 // pred_fallthru
          _
      $region109: #{gnn_forward.3} parent=5 // pred_fallthru
        _
    $region6: #{gnn_forward.3} parent=1 // loop_footer
      %s19 = sadd.s32 1, %s15
    $region7: #{gnn_forward.3} parent=1 // loop_footer_branch
      %14 = sbr.rel target = $region3
    $region8: #{gnn_forward.3} parent=1 // loop_exit
      _

// kernel: gnn_forward.2
$region0: #{gnn_forward.2}
  #allocation0 [shape = 'u32[]', space=smem, size = 0x4, offset = 0x4, fixed_abs, tag = 'smem constant byte address 0x4 - core index']
  #allocation1 [shape = 'u32[72,128]{1,0:T(1,128)}', space=vmem, size = 0x9000, scoped, tag = 'internal scratch']
  #allocation2 [shape = 'f32[128,128]{1,0:T(8,128)}', space=vmem, size = 0x10000, scoped, tag = 'scratch operand']
  %s0 = inlined_call_operand.vmem [shape: bf16[256,256], index: 0, kind: input, shape index: {}]
  %s1 = inlined_call_operand.vmem [shape: f32[256,1], index: 1, kind: input, shape index: {}]
  %s2 = inlined_call_operand.vmem [shape: bf16[256,128], index: 2, kind: input, shape index: {}, may-alias: {2,3}]
  %s3 = inlined_call_operand.vmem [shape: bf16[256,128], index: 3, kind: input, shape index: {}, may-alias: {2,3}]
  %s4 = inlined_call_operand.vmem [shape: f32[128,128], index: 4, kind: input, shape index: {}]
  %s5 = inlined_call_operand.vmem [shape: f32[128,128], index: 5, kind: input, shape index: {}]
  %s6 = inlined_call_operand.vmem [shape: f32[1,128], index: 6, kind: input, shape index: {}]
  %s7 = inlined_call_operand.vmem [shape: bf16[256,128], index: 7, kind: output, shape index: {}]
  %s8 = sld [smem:[#allocation0]]
  $region110: #{gnn_forward.2} parent=0
    _
  %s10 = ssub.s32 1, %s8
  %s11 = scalar_select 0, %s10, %s8
  $region1: #{gnn_forward.2} parent=0
    #allocation3 [shape = 'u8[65536]{0}', space=vmem, size = 0x10000, scoped, tag = 'input window, operand 0']
    loop: start=0, step=1, limit=6
    $region2: #{gnn_forward.2} parent=1 // loop_pre_header
      _
    $region3: #{gnn_forward.2} parent=1 // loop_header
      %s13 = sphi 0, %s17
      %p14 = scmp.ge.s32.totalorder %s13, 6
      %s20 = sphi 0, %s32
      %s21 = sphi 0, %s28
      %s22 = sphi 0, %s20
      %s23 = sphi 0, %s21
      %s24 = sphi 0, %s22
      %s25 = sphi 0, %s23
      %s37 = sphi 0, %s39
      %s40 = sphi 0, %s37
      %s41 = sphi 0, %s40
      %s57 = sphi 0, %s41
      %s63 = sphi 0, %s65
      %s66 = sphi 0, %s63
      %s67 = sphi 0, %s66
      %s83 = sphi 0, %s67
      %s89 = sphi 0, %s91
      %s92 = sphi 0, %s89
      %s93 = sphi 0, %s92
      %s109 = sphi 0, %s93
      %s115 = sphi 0, %s117
      %s118 = sphi 0, %s115
      %s119 = sphi 0, %s118
      %s135 = sphi 0, %s119
      %s139 = sphi 0, %s139
      %s141 = sphi 0, %s139
      %s142 = sphi 0, %s141
      %s156 = sphi 0, %s142
      %s160 = sphi 0, %s160
      %s162 = sphi 0, %s160
      %s163 = sphi 0, %s162
      %s177 = sphi 0, %s163
      %s181 = sphi 0, %s181
      %s183 = sphi 0, %s181
      %s184 = sphi 0, %s183
      %s198 = sphi 0, %s184
      %s204 = sphi 0, %s206
      %s207 = sphi 0, %s204
      %s208 = sphi 0, %s207
      %s224 = sphi 0, %s208
    $region4: #{gnn_forward.2} parent=1 // loop_header_branch
      %16 = sbr.rel (%p14) target = $region8
    $region5: #{gnn_forward.2} parent=1 // loop_body
      %s18 = ssub.s32 %s13, 1
      %s19 = ssub.s32 %s13, 2
      %s26 = sadd.s32 1, %s21
      %p27 = scmp.ge.s32.totalorder %s26, 2
      %s28 = scalar_select %p27, 0, %s26
      %s29 = sadd.s32 1, %s20
      %s30 = scalar_select %p27, %s29, %s20
      %p31 = scmp.ge.s32.totalorder %s30, 2
      %s32 = scalar_select %p31, 0, %s30
      %s33 = ssub.s32 %s20, %s32
      %s34 = ssub.s32 %s21, %s28
      %s35 = sor.u32 %s33, %s34
      %p36 = scmp.eq.s32.totalorder %s35, 0
      %s38 = sadd.s32 %s37, 1
      %s39 = scalar_select %p36, %s37, %s38
      %p42 = pneg %p36
      %p43 = scmp.eq.s32.totalorder %s13, 3
      %p44 = por %p42, %p43
      %p45 = scmp.ne.s32.totalorder %s37, %s40
      %p46 = scmp.eq.s32.totalorder %s13, 0
      %p47 = por %p45, %p46
      %p48 = scmp.ne.s32.totalorder %s37, %s40
      %p49 = scmp.eq.s32.totalorder %s18, 3
      %p50 = por %p48, %p49
      %p51 = scmp.ne.s32.totalorder %s40, %s41
      %p52 = scmp.eq.s32.totalorder %s18, 0
      %p53 = por %p51, %p52
      %p54 = scmp.ne.s32.totalorder %s40, %s41
      %p55 = scmp.eq.s32.totalorder %s19, 3
      %p56 = por %p54, %p55
      %p58 = scmp.ne.s32.totalorder %s41, %s57
      %p59 = scmp.eq.s32.totalorder %s19, 0
      %p60 = por %p58, %p59
      %s61 = ssub.s32 %s20, %s32
      %p62 = scmp.eq.s32.totalorder %s61, 0
      %s64 = sadd.s32 %s63, 1
      %s65 = scalar_select %p62, %s63, %s64
      %p68 = pneg %p62
      %p69 = scmp.eq.s32.totalorder %s13, 3
      %p70 = por %p68, %p69
      %p71 = scmp.ne.s32.totalorder %s63, %s66
      %p72 = scmp.eq.s32.totalorder %s13, 0
      %p73 = por %p71, %p72
      %p74 = scmp.ne.s32.totalorder %s63, %s66
      %p75 = scmp.eq.s32.totalorder %s18, 3
      %p76 = por %p74, %p75
      %p77 = scmp.ne.s32.totalorder %s66, %s67
      %p78 = scmp.eq.s32.totalorder %s18, 0
      %p79 = por %p77, %p78
      %p80 = scmp.ne.s32.totalorder %s66, %s67
      %p81 = scmp.eq.s32.totalorder %s19, 3
      %p82 = por %p80, %p81
      %p84 = scmp.ne.s32.totalorder %s67, %s83
      %p85 = scmp.eq.s32.totalorder %s19, 0
      %p86 = por %p84, %p85
      %s87 = ssub.s32 %s21, %s28
      %p88 = scmp.eq.s32.totalorder %s87, 0
      %s90 = sadd.s32 %s89, 1
      %s91 = scalar_select %p88, %s89, %s90
      %p94 = pneg %p88
      %p95 = scmp.eq.s32.totalorder %s13, 3
      %p96 = por %p94, %p95
      %p97 = scmp.ne.s32.totalorder %s89, %s92
      %p98 = scmp.eq.s32.totalorder %s13, 0
      %p99 = por %p97, %p98
      %p100 = scmp.ne.s32.totalorder %s89, %s92
      %p101 = scmp.eq.s32.totalorder %s18, 3
      %p102 = por %p100, %p101
      %p103 = scmp.ne.s32.totalorder %s92, %s93
      %p104 = scmp.eq.s32.totalorder %s18, 0
      %p105 = por %p103, %p104
      %p106 = scmp.ne.s32.totalorder %s92, %s93
      %p107 = scmp.eq.s32.totalorder %s19, 3
      %p108 = por %p106, %p107
      %p110 = scmp.ne.s32.totalorder %s93, %s109
      %p111 = scmp.eq.s32.totalorder %s19, 0
      %p112 = por %p110, %p111
      %s113 = ssub.s32 %s20, %s32
      %p114 = scmp.eq.s32.totalorder %s113, 0
      %s116 = sadd.s32 %s115, 1
      %s117 = scalar_select %p114, %s115, %s116
      %p120 = pneg %p114
      %p121 = scmp.eq.s32.totalorder %s13, 3
      %p122 = por %p120, %p121
      %p123 = scmp.ne.s32.totalorder %s115, %s118
      %p124 = scmp.eq.s32.totalorder %s13, 0
      %p125 = por %p123, %p124
      %p126 = scmp.ne.s32.totalorder %s115, %s118
      %p127 = scmp.eq.s32.totalorder %s18, 3
      %p128 = por %p126, %p127
      %p129 = scmp.ne.s32.totalorder %s118, %s119
      %p130 = scmp.eq.s32.totalorder %s18, 0
      %p131 = por %p129, %p130
      %p132 = scmp.ne.s32.totalorder %s118, %s119
      %p133 = scmp.eq.s32.totalorder %s19, 3
      %p134 = por %p132, %p133
      %p136 = scmp.ne.s32.totalorder %s119, %s135
      %p137 = scmp.eq.s32.totalorder %s19, 0
      %p138 = por %p136, %p137
      %s140 = sadd.s32 %s139, 1
      %p143 = scmp.eq.s32.totalorder %s13, 3
      %p144 = scmp.ne.s32.totalorder %s139, %s141
      %p145 = scmp.eq.s32.totalorder %s13, 0
      %p146 = por %p144, %p145
      %p147 = scmp.ne.s32.totalorder %s139, %s141
      %p148 = scmp.eq.s32.totalorder %s18, 3
      %p149 = por %p147, %p148
      %p150 = scmp.ne.s32.totalorder %s141, %s142
      %p151 = scmp.eq.s32.totalorder %s18, 0
      %p152 = por %p150, %p151
      %p153 = scmp.ne.s32.totalorder %s141, %s142
      %p154 = scmp.eq.s32.totalorder %s19, 3
      %p155 = por %p153, %p154
      %p157 = scmp.ne.s32.totalorder %s142, %s156
      %p158 = scmp.eq.s32.totalorder %s19, 0
      %p159 = por %p157, %p158
      %s161 = sadd.s32 %s160, 1
      %p164 = scmp.eq.s32.totalorder %s13, 3
      %p165 = scmp.ne.s32.totalorder %s160, %s162
      %p166 = scmp.eq.s32.totalorder %s13, 0
      %p167 = por %p165, %p166
      %p168 = scmp.ne.s32.totalorder %s160, %s162
      %p169 = scmp.eq.s32.totalorder %s18, 3
      %p170 = por %p168, %p169
      %p171 = scmp.ne.s32.totalorder %s162, %s163
      %p172 = scmp.eq.s32.totalorder %s18, 0
      %p173 = por %p171, %p172
      %p174 = scmp.ne.s32.totalorder %s162, %s163
      %p175 = scmp.eq.s32.totalorder %s19, 3
      %p176 = por %p174, %p175
      %p178 = scmp.ne.s32.totalorder %s163, %s177
      %p179 = scmp.eq.s32.totalorder %s19, 0
      %p180 = por %p178, %p179
      %s182 = sadd.s32 %s181, 1
      %p185 = scmp.eq.s32.totalorder %s13, 3
      %p186 = scmp.ne.s32.totalorder %s181, %s183
      %p187 = scmp.eq.s32.totalorder %s13, 0
      %p188 = por %p186, %p187
      %p189 = scmp.ne.s32.totalorder %s181, %s183
      %p190 = scmp.eq.s32.totalorder %s18, 3
      %p191 = por %p189, %p190
      %p192 = scmp.ne.s32.totalorder %s183, %s184
      %p193 = scmp.eq.s32.totalorder %s18, 0
      %p194 = por %p192, %p193
      %p195 = scmp.ne.s32.totalorder %s183, %s184
      %p196 = scmp.eq.s32.totalorder %s19, 3
      %p197 = por %p195, %p196
      %p199 = scmp.ne.s32.totalorder %s184, %s198
      %p200 = scmp.eq.s32.totalorder %s19, 0
      %p201 = por %p199, %p200
      %s202 = ssub.s32 %s20, %s32
      %p203 = scmp.eq.s32.totalorder %s202, 0
      %s205 = sadd.s32 %s204, 1
      %s206 = scalar_select %p203, %s204, %s205
      %p209 = pneg %p203
      %p210 = scmp.eq.s32.totalorder %s13, 3
      %p211 = por %p209, %p210
      %p212 = scmp.ne.s32.totalorder %s204, %s207
      %p213 = scmp.eq.s32.totalorder %s13, 0
      %p214 = por %p212, %p213
      %p215 = scmp.ne.s32.totalorder %s204, %s207
      %p216 = scmp.eq.s32.totalorder %s18, 3
      %p217 = por %p215, %p216
      %p218 = scmp.ne.s32.totalorder %s207, %s208
      %p219 = scmp.eq.s32.totalorder %s18, 0
      %p220 = por %p218, %p219
      %p221 = scmp.ne.s32.totalorder %s207, %s208
      %p222 = scmp.eq.s32.totalorder %s19, 3
      %p223 = por %p221, %p222
      %p225 = scmp.ne.s32.totalorder %s208, %s224
      %p226 = scmp.eq.s32.totalorder %s19, 0
      %p227 = por %p225, %p226
      %p228 = scmp.le.s32.totalorder 1, %s13
      %p229 = scmp.lt.s32.totalorder %s13, 5
      %p230 = pnand %p228, %p229
      %p231 = pneg %p230
      // Predicated region
      $region9: #{gnn_forward.2} parent=5 // pred_check
        _
      $region10: #{gnn_forward.2} parent=5 // pred_check_branch
        %233 = sbr.rel (%p230) target = $region12
      $region11: #{gnn_forward.2} parent=5 // pred_region
        %s234 = ssub.s32 %s13, 1
        // Predicated region
        $region13: #{gnn_forward.2} parent=11 // pred_check
          %p235 = pneg %p152
        $region14: #{gnn_forward.2} parent=11 // pred_check_branch
          %237 = sbr.rel (%p235) target = $region16
        $region15: #{gnn_forward.2} parent=11 // pred_region
          _
        $region16: #{gnn_forward.2} parent=11 // pred_fallthru
          _
        // Predicated region
        $region17: #{gnn_forward.2} parent=11 // pred_check
          %p238 = pneg %p173
        $region18: #{gnn_forward.2} parent=11 // pred_check_branch
          %240 = sbr.rel (%p238) target = $region20
        $region19: #{gnn_forward.2} parent=11 // pred_region
          _
        $region20: #{gnn_forward.2} parent=11 // pred_fallthru
          _
        // Predicated region
        $region21: #{gnn_forward.2} parent=11 // pred_check
          %p241 = pneg %p194
        $region22: #{gnn_forward.2} parent=11 // pred_check_branch
          %243 = sbr.rel (%p241) target = $region24
        $region23: #{gnn_forward.2} parent=11 // pred_region
          _
        $region24: #{gnn_forward.2} parent=11 // pred_fallthru
          _
      $region12: #{gnn_forward.2} parent=5 // pred_fallthru
        _
      %p244 = scmp.lt.s32.totalorder %s13, 4
      // Predicated region
      $region25: #{gnn_forward.2} parent=5 // pred_check
        %p245 = pneg %p244
      $region26: #{gnn_forward.2} parent=5 // pred_check_branch
        %247 = sbr.rel (%p245) target = $region28
      $region27: #{gnn_forward.2} parent=5 // pred_region
        // Predicated region
        $region29: #{gnn_forward.2} parent=27 // pred_check
          %p248 = pneg %p47
        $region30: #{gnn_forward.2} parent=27 // pred_check_branch
          %250 = sbr.rel (%p248) target = $region32
        $region31: #{gnn_forward.2} parent=27 // pred_region
          %s251 = sand.u32 %s37, 1
          %s252 = sand.u32 %s37, 1
          %s253 = smul.addr %s252, 64
          %s254 = scalar_lea.vmem [#allocation3], %s253
          %s255 = smul.u32 16, %s20
          %s256 = smul.addr %s255, 2
          %s257 = sadd.s32 %s21, %s256
          %s258 = smul.addr %s257, 4
          %s259 = scalar_lea.vmem %s0, %s258
          // Predicated region
          $region33: #{gnn_forward.2} parent=31 // pred_check
            _
          $region34: #{gnn_forward.2} parent=31 // pred_check_branch
            %261 = sbr.rel (0) target = $region36
          $region35: #{gnn_forward.2} parent=31 // pred_region
            // Predicated region
            $region37: #{gnn_forward.2} parent=35 // pred_check
              _
            $region38: #{gnn_forward.2} parent=35 // pred_check_branch
              %263 = sbr.rel target = $region40
            $region39: #{gnn_forward.2} parent=35 // pred_region
              // Predicated region
              $region52: #{gnn_forward.2} parent=39 // pred_check
                _
              $region53: #{gnn_forward.2} parent=39 // pred_check_branch
                %309 = sbr.rel (0) target = $region55
              $region54: #{gnn_forward.2} parent=39 // pred_region
                loop: start=0, step=1, limit=1
                $region56: #{gnn_forward.2} parent=54 // loop_pre_header
                  _
                $region57: #{gnn_forward.2} parent=54 // loop_header
                  %s311 = sphi 0, %s315
                  %p312 = scmp.ge.s32.totalorder %s311, 1
                  %s316 = sphi %s259, %s259
                  %s317 = sphi %s254, %s254
                $region58: #{gnn_forward.2} parent=54 // loop_header_branch
                  %314 = sbr.rel (%p312) target = $region62
                $region59: #{gnn_forward.2} parent=54 // loop_body
                  _
                $region60: #{gnn_forward.2} parent=54 // loop_footer
                  %s315 = sadd.s32 1, %s311
                $region61: #{gnn_forward.2} parent=54 // loop_footer_branch
                  %310 = sbr.rel target = $region57
                $region62: #{gnn_forward.2} parent=54 // loop_exit
                  _
                %s319 = ssub.s32 16, 1
                loop: start=0, step=1, limit=1
                $region63: #{gnn_forward.2} parent=54 // loop_pre_header
                  _
                $region64: #{gnn_forward.2} parent=54 // loop_header
                  %s321 = sphi 0, %s325
                  %p322 = scmp.ge.s32.totalorder %s321, 1
                  %s326 = sphi %s259, %s259
                  %s327 = sphi %s254, %s254
                $region65: #{gnn_forward.2} parent=54 // loop_header_branch
                  %324 = sbr.rel (%p322) target = $region69
                $region66: #{gnn_forward.2} parent=54 // loop_body
                  %v328 = vld [vmem:[%s326] sm:%s319]
                  %329 = vst [vmem:[%s327] sm:%s319] %v328
                  %v330 = vld [vmem:[%s326 + $0x8] sm:%s319]
                  %331 = vst [vmem:[%s327 + $0x4] sm:%s319] %v330
                  %v332 = vld [vmem:[%s326 + $0x10] sm:%s319]
                  %333 = vst [vmem:[%s327 + $0x8] sm:%s319] %v332
                  %v334 = vld [vmem:[%s326 + $0x18] sm:%s319]
                  %335 = vst [vmem:[%s327 + $0xc] sm:%s319] %v334
                  %v336 = vld [vmem:[%s326 + $0x20] sm:%s319]
                  %337 = vst [vmem:[%s327 + $0x10] sm:%s319] %v336
                  %v338 = vld [vmem:[%s326 + $0x28] sm:%s319]
                  %339 = vst [vmem:[%s327 + $0x14] sm:%s319] %v338
                  %v340 = vld [vmem:[%s326 + $0x30] sm:%s319]
                  %341 = vst [vmem:[%s327 + $0x18] sm:%s319] %v340
                  %v342 = vld [vmem:[%s326 + $0x38] sm:%s319]
                  %343 = vst [vmem:[%s327 + $0x1c] sm:%s319] %v342
                  %v344 = vld [vmem:[%s326 + $0x40] sm:%s319]
                  %345 = vst [vmem:[%s327 + $0x20] sm:%s319] %v344
                  %v346 = vld [vmem:[%s326 + $0x48] sm:%s319]
                  %347 = vst [vmem:[%s327 + $0x24] sm:%s319] %v346
                  %v348 = vld [vmem:[%s326 + $0x50] sm:%s319]
                  %349 = vst [vmem:[%s327 + $0x28] sm:%s319] %v348
                  %v350 = vld [vmem:[%s326 + $0x58] sm:%s319]
                  %351 = vst [vmem:[%s327 + $0x2c] sm:%s319] %v350
                  %v352 = vld [vmem:[%s326 + $0x60] sm:%s319]
                  %353 = vst [vmem:[%s327 + $0x30] sm:%s319] %v352
                  %v354 = vld [vmem:[%s326 + $0x68] sm:%s319]
                  %355 = vst [vmem:[%s327 + $0x34] sm:%s319] %v354
                  %v356 = vld [vmem:[%s326 + $0x70] sm:%s319]
                  %357 = vst [vmem:[%s327 + $0x38] sm:%s319] %v356
                  %v358 = vld [vmem:[%s326 + $0x78] sm:%s319]
                  %359 = vst [vmem:[%s327 + $0x3c] sm:%s319] %v358
                $region67: #{gnn_forward.2} parent=54 // loop_footer
                  %s325 = sadd.s32 1, %s321
                $region68: #{gnn_forward.2} parent=54 // loop_footer_branch
                  %320 = sbr.rel target = $region64
                $region69: #{gnn_forward.2} parent=54 // loop_exit
                  _
              $region55: #{gnn_forward.2} parent=39 // pred_fallthru
                _
            $region40: #{gnn_forward.2} parent=35 // pred_fallthru
              _
            // Predicated region
            $region41: #{gnn_forward.2} parent=35 // pred_check
              _
            $region42: #{gnn_forward.2} parent=35 // pred_check_branch
              %265 = sbr.rel (0) target = $region44
            $region43: #{gnn_forward.2} parent=35 // pred_region
              %s267 = ssub.s32 16, 1
              loop: start=0, step=1, limit=1
              $region45: #{gnn_forward.2} parent=43 // loop_pre_header
                _
              $region46: #{gnn_forward.2} parent=43 // loop_header
                %s269 = sphi 0, %s273
                %p270 = scmp.ge.s32.totalorder %s269, 1
                %s274 = sphi %s259, %s259
                %s275 = sphi %s254, %s254
              $region47: #{gnn_forward.2} parent=43 // loop_header_branch
                %272 = sbr.rel (%p270) target = $region51
              $region48: #{gnn_forward.2} parent=43 // loop_body
                %v276 = vld [vmem:[%s274] sm:%s267]
                %277 = vst [vmem:[%s275] sm:%s267] %v276
                %v278 = vld [vmem:[%s274 + $0x8] sm:%s267]
                %279 = vst [vmem:[%s275 + $0x4] sm:%s267] %v278
                %v280 = vld [vmem:[%s274 + $0x10] sm:%s267]
                %281 = vst [vmem:[%s275 + $0x8] sm:%s267] %v280
                %v282 = vld [vmem:[%s274 + $0x18] sm:%s267]
                %283 = vst [vmem:[%s275 + $0xc] sm:%s267] %v282
                %v284 = vld [vmem:[%s274 + $0x20] sm:%s267]
                %285 = vst [vmem:[%s275 + $0x10] sm:%s267] %v284
                %v286 = vld [vmem:[%s274 + $0x28] sm:%s267]
                %287 = vst [vmem:[%s275 + $0x14] sm:%s267] %v286
                %v288 = vld [vmem:[%s274 + $0x30] sm:%s267]
                %289 = vst [vmem:[%s275 + $0x18] sm:%s267] %v288
                %v290 = vld [vmem:[%s274 + $0x38] sm:%s267]
                %291 = vst [vmem:[%s275 + $0x1c] sm:%s267] %v290
                %v292 = vld [vmem:[%s274 + $0x40] sm:%s267]
                %293 = vst [vmem:[%s275 + $0x20] sm:%s267] %v292
                %v294 = vld [vmem:[%s274 + $0x48] sm:%s267]
                %295 = vst [vmem:[%s275 + $0x24] sm:%s267] %v294
                %v296 = vld [vmem:[%s274 + $0x50] sm:%s267]
                %297 = vst [vmem:[%s275 + $0x28] sm:%s267] %v296
                %v298 = vld [vmem:[%s274 + $0x58] sm:%s267]
                %299 = vst [vmem:[%s275 + $0x2c] sm:%s267] %v298
                %v300 = vld [vmem:[%s274 + $0x60] sm:%s267]
                %301 = vst [vmem:[%s275 + $0x30] sm:%s267] %v300
                %v302 = vld [vmem:[%s274 + $0x68] sm:%s267]
                %303 = vst [vmem:[%s275 + $0x34] sm:%s267] %v302
                %v304 = vld [vmem:[%s274 + $0x70] sm:%s267]
                %305 = vst [vmem:[%s275 + $0x38] sm:%s267] %v304
                %v306 = vld [vmem:[%s274 + $0x78] sm:%s267]
                %307 = vst [vmem:[%s275 + $0x3c] sm:%s267] %v306
              $region49: #{gnn_forward.2} parent=43 // loop_footer
                %s273 = sadd.s32 1, %s269
              $region50: #{gnn_forward.2} parent=43 // loop_footer_branch
                %268 = sbr.rel target = $region46
              $region51: #{gnn_forward.2} parent=43 // loop_exit
                _
            $region44: #{gnn_forward.2} parent=35 // pred_fallthru
              _
          $region36: #{gnn_forward.2} parent=31 // pred_fallthru
            _
          %360 = vnop
        $region32: #{gnn_forward.2} parent=27 // pred_fallthru
          _
        // Predicated region
        $region70: #{gnn_forward.2} parent=27 // pred_check
          %p361 = pneg %p73
        $region71: #{gnn_forward.2} parent=27 // pred_check_branch
          %363 = sbr.rel (%p361) target = $region73
        $region72: #{gnn_forward.2} parent=27 // pred_region
          %s364 = smul.u32 16, %s20
          %p365 = scmp.lt.s32.totalorder %s364, 31
          %s366 = scalar_select %p365, %s364, 31
          %s367 = smul.addr %s366, 8
          %s368 = scalar_lea.vmem %s1, %s367
          %s369 = smul.u32 16, %s20
        $region73: #{gnn_forward.2} parent=27 // pred_fallthru
          _
        // Predicated region
        $region74: #{gnn_forward.2} parent=27 // pred_check
          %p370 = pneg %p99
        $region75: #{gnn_forward.2} parent=27 // pred_check_branch
          %372 = sbr.rel (%p370) target = $region77
        $region76: #{gnn_forward.2} parent=27 // pred_region
          %s373 = smul.u32 16, %s21
          %p374 = scmp.lt.s32.totalorder %s373, 31
          %s375 = scalar_select %p374, %s373, 31
          %s376 = smul.addr %s375, 4
          %s377 = scalar_lea.vmem %s2, %s376
          %s378 = smul.u32 16, %s21
        $region77: #{gnn_forward.2} parent=27 // pred_fallthru
          _
        // Predicated region
        $region78: #{gnn_forward.2} parent=27 // pred_check
          %p379 = pneg %p125
        $region79: #{gnn_forward.2} parent=27 // pred_check_branch
          %381 = sbr.rel (%p379) target = $region81
        $region80: #{gnn_forward.2} parent=27 // pred_region
          %s382 = smul.u32 16, %s20
          %p383 = scmp.lt.s32.totalorder %s382, 31
          %s384 = scalar_select %p383, %s382, 31
          %s385 = smul.addr %s384, 4
          %s386 = scalar_lea.vmem %s3, %s385
          %s387 = smul.u32 16, %s20
        $region81: #{gnn_forward.2} parent=27 // pred_fallthru
          _
      $region28: #{gnn_forward.2} parent=5 // pred_fallthru
        _
      %p388 = scmp.le.s32.totalorder 1, %s13
      %p389 = scmp.lt.s32.totalorder %s13, 5
      %p390 = pnand %p388, %p389
      %p391 = pneg %p390
      // Predicated region
      $region82: #{gnn_forward.2} parent=5 // pred_check
        _
      $region83: #{gnn_forward.2} parent=5 // pred_check_branch
        %393 = sbr.rel (%p390) target = $region85
      $region84: #{gnn_forward.2} parent=5 // pred_region
        %s394 = ssub.s32 %s13, 1
        %s395 = sand.u32 %s40, 1
        %s396 = sand.u32 %s40, 1
        %s397 = smul.addr %s396, 64
        %s398 = scalar_lea.vmem [#allocation3], %s397
        // Predicated region
        $region86: #{gnn_forward.2} parent=84 // pred_check
          %p399 = pneg %p53
        $region87: #{gnn_forward.2} parent=84 // pred_check_branch
          %401 = sbr.rel (%p399) target = $region89
        $region88: #{gnn_forward.2} parent=84 // pred_region
          _
        $region89: #{gnn_forward.2} parent=84 // pred_fallthru
          _
        %s402 = sand.u32 %s40, 1
        %s403 = sand.u32 %s40, 1
        %s404 = smul.addr %s403, 64
        %s405 = scalar_lea.vmem [#allocation3], %s404
        %p406 = pneg %p53
        %p407 = pneg %p50
        %s408 = smul.u32 16, %s22
        %p409 = scmp.lt.s32.totalorder %s408, 31
        %s410 = scalar_select %p409, %s408, 31
        %s411 = smul.addr %s410, 8
        %s412 = scalar_lea.vmem %s1, %s411
        %p413 = pneg %p79
        %p414 = pneg %p76
        %s415 = smul.u32 16, %s23
        %p416 = scmp.lt.s32.totalorder %s415, 31
        %s417 = scalar_select %p416, %s415, 31
        %s418 = smul.addr %s417, 4
        %s419 = scalar_lea.vmem %s2, %s418
        %p420 = pneg %p105
        %p421 = pneg %p102
        %s422 = smul.u32 16, %s22
        %p423 = scmp.lt.s32.totalorder %s422, 31
        %s424 = scalar_select %p423, %s422, 31
        %s425 = smul.addr %s424, 4
        %s426 = scalar_lea.vmem %s3, %s425
        %p427 = pneg %p131
        %p428 = pneg %p128
        %p429 = pneg %p152
        %p430 = pneg %p149
        %p431 = pneg %p173
        %p432 = pneg %p170
        %p433 = pneg %p194
        %p434 = pneg %p191
        %p435 = pneg %p220
        %p436 = pneg %p217
        %s437 = smul.u32 16, %s22
        %p438 = scmp.lt.s32.totalorder %s437, 31
        %s439 = scalar_select %p438, %s437, 31
        %s440 = smul.addr %s439, 4
        %s441 = scalar_lea.vmem %s7, %s440
        %s442 = smul.u32 16, %s22
        %s443 = smul.u32 16, %s22
        %p444 = scmp.lt.s32.totalorder %s443, 31
        %s445 = scalar_select %p444, %s443, 31
        %s446 = smul.addr %s445, 8
        %s447 = scalar_lea.vmem %s1, %s446
        %s448 = smul.u32 16, %s22
        %s449 = smul.u32 16, %s23
        %p450 = scmp.lt.s32.totalorder %s449, 31
        %s451 = scalar_select %p450, %s449, 31
        %s452 = smul.addr %s451, 4
        %s453 = scalar_lea.vmem %s2, %s452
        %s454 = smul.u32 16, %s23
        %s455 = smul.u32 16, %s22
        %p456 = scmp.lt.s32.totalorder %s455, 31
        %s457 = scalar_select %p456, %s455, 31
        %s458 = smul.addr %s457, 4
        %s459 = scalar_lea.vmem %s3, %s458
        %s460 = smul.u32 16, %s22
        %s461 = smul.u32 16, %s22
        %p462 = scmp.lt.s32.totalorder %s461, 31
        %s463 = scalar_select %p462, %s461, 31
        %s464 = smul.addr %s463, 4
        %s465 = scalar_lea.vmem %s7, %s464
        %s466 = smul.u32 16, %s22
        %p467 = scmp.eq.s32.totalorder %s23, 0
        // Predicated region
        $region90: #{gnn_forward.2} parent=84 // pred_check
          %p468 = pneg %p467
        $region91: #{gnn_forward.2} parent=84 // pred_check_branch
          %470 = sbr.rel (%p468) target = $region93
        $region92: #{gnn_forward.2} parent=84 // pred_region
          %471 = vst [vmem:[#allocation2] sm:$0xff] 0.0
          %472 = vst [vmem:[#allocation2 + $0x8] sm:$0xff] 0.0
          %473 = vst [vmem:[#allocation2 + $0x10] sm:$0xff] 0.0
          %474 = vst [vmem:[#allocation2 + $0x18] sm:$0xff] 0.0
          %475 = vst [vmem:[#allocation2 + $0x20] sm:$0xff] 0.0
          %476 = vst [vmem:[#allocation2 + $0x28] sm:$0xff] 0.0
          %477 = vst [vmem:[#allocation2 + $0x30] sm:$0xff] 0.0
          %478 = vst [vmem:[#allocation2 + $0x38] sm:$0xff] 0.0
          %479 = vst [vmem:[#allocation2 + $0x40] sm:$0xff] 0.0
          %480 = vst [vmem:[#allocation2 + $0x48] sm:$0xff] 0.0
          %481 = vst [vmem:[#allocation2 + $0x50] sm:$0xff] 0.0
          %482 = vst [vmem:[#allocation2 + $0x58] sm:$0xff] 0.0
          %483 = vst [vmem:[#allocation2 + $0x60] sm:$0xff] 0.0
          %484 = vst [vmem:[#allocation2 + $0x68] sm:$0xff] 0.0
          %485 = vst [vmem:[#allocation2 + $0x70] sm:$0xff] 0.0
          %486 = vst [vmem:[#allocation2 + $0x78] sm:$0xff] 0.0
        $region93: #{gnn_forward.2} parent=84 // pred_fallthru
          _
        %v487 = vld [vmem:[#allocation2] sm:$0xff]
        %v488 = vld [vmem:[#allocation2 + $0x8] sm:$0xff]
        %v489 = vld [vmem:[#allocation2 + $0x10] sm:$0xff]
        %v490 = vld [vmem:[#allocation2 + $0x18] sm:$0xff]
        %v491 = vld [vmem:[#allocation2 + $0x20] sm:$0xff]
        %v492 = vld [vmem:[#allocation2 + $0x28] sm:$0xff]
        %v493 = vld [vmem:[#allocation2 + $0x30] sm:$0xff]
        %v494 = vld [vmem:[#allocation2 + $0x38] sm:$0xff]
        %v495 = vld [vmem:[#allocation2 + $0x40] sm:$0xff]
        %v496 = vld [vmem:[#allocation2 + $0x48] sm:$0xff]
        %v497 = vld [vmem:[#allocation2 + $0x50] sm:$0xff]
        %v498 = vld [vmem:[#allocation2 + $0x58] sm:$0xff]
        %v499 = vld [vmem:[#allocation2 + $0x60] sm:$0xff]
        %v500 = vld [vmem:[#allocation2 + $0x68] sm:$0xff]
        %v501 = vld [vmem:[#allocation2 + $0x70] sm:$0xff]
        %v502 = vld [vmem:[#allocation2 + $0x78] sm:$0xff]
        %v503 = vld [vmem:[%s398] sm:$0xf]
        %v504 = vld [vmem:[%s398 + $0x4] sm:$0xf]
        %v505 = vld [vmem:[%s398 + $0x8] sm:$0xf]
        %v506 = vld [vmem:[%s398 + $0xc] sm:$0xf]
        %v507 = vld [vmem:[%s398 + $0x10] sm:$0xf]
        %v508 = vld [vmem:[%s398 + $0x14] sm:$0xf]
        %v509 = vld [vmem:[%s398 + $0x18] sm:$0xf]
        %v510 = vld [vmem:[%s398 + $0x1c] sm:$0xf]
        %v511 = vld [vmem:[%s398 + $0x20] sm:$0xf]
        %v512 = vld [vmem:[%s398 + $0x24] sm:$0xf]
        %v513 = vld [vmem:[%s398 + $0x28] sm:$0xf]
        %v514 = vld [vmem:[%s398 + $0x2c] sm:$0xf]
        %v515 = vld [vmem:[%s398 + $0x30] sm:$0xf]
        %v516 = vld [vmem:[%s398 + $0x34] sm:$0xf]
        %v517 = vld [vmem:[%s398 + $0x38] sm:$0xf]
        %v518 = vld [vmem:[%s398 + $0x3c] sm:$0xf]
        %v519 = vld [vmem:[%s453] sm:$0xf]
        %v520 = vld [vmem:[%s453 + $0x4] sm:$0xf]
        %v521 = vld [vmem:[%s453 + $0x8] sm:$0xf]
        %v522 = vld [vmem:[%s453 + $0xc] sm:$0xf]
        %v523 = vld [vmem:[%s453 + $0x10] sm:$0xf]
        %v524 = vld [vmem:[%s453 + $0x14] sm:$0xf]
        %v525 = vld [vmem:[%s453 + $0x18] sm:$0xf]
        %v526 = vld [vmem:[%s453 + $0x1c] sm:$0xf]
        %v527 = vld [vmem:[%s453 + $0x20] sm:$0xf]
        %v528 = vld [vmem:[%s453 + $0x24] sm:$0xf]
        %v529 = vld [vmem:[%s453 + $0x28] sm:$0xf]
        %v530 = vld [vmem:[%s453 + $0x2c] sm:$0xf]
        %v531 = vld [vmem:[%s453 + $0x30] sm:$0xf]
        %v532 = vld [vmem:[%s453 + $0x34] sm:$0xf]
        %v533 = vld [vmem:[%s453 + $0x38] sm:$0xf]
        %v534 = vld [vmem:[%s453 + $0x3c] sm:$0xf]
        %v551 = vunpack.c.l.b16 %v503
        %v552 = vunpack.c.l.b16 %v504
        %v553 = vunpack.c.l.b16 %v505
        %v554 = vunpack.c.l.b16 %v506
        %v555 = vunpack.c.l.b16 %v507
        %v556 = vunpack.c.l.b16 %v508
        %v557 = vunpack.c.l.b16 %v509
        %v558 = vunpack.c.l.b16 %v510
        %v559 = vunpack.c.l.b16 %v511
        %v560 = vunpack.c.l.b16 %v512
        %v561 = vunpack.c.l.b16 %v513
        %v562 = vunpack.c.l.b16 %v514
        %v563 = vunpack.c.l.b16 %v515
        %v564 = vunpack.c.l.b16 %v516
        %v565 = vunpack.c.l.b16 %v517
        %v566 = vunpack.c.l.b16 %v518
        %v567 = vpack.c.b16 %v552, %v551
        %v568 = vpack.c.b16 %v554, %v553
        %v569 = vpack.c.b16 %v556, %v555
        %v570 = vpack.c.b16 %v558, %v557
        %v571 = vpack.c.b16 %v560, %v559
        %v572 = vpack.c.b16 %v562, %v561
        %v573 = vpack.c.b16 %v564, %v563
        %v574 = vpack.c.b16 %v566, %v565
        %v599 = vunpack.c.l.b16 %v519
        %v600 = vunpack.c.l.b16 %v520
        %v601 = vunpack.c.l.b16 %v521
        %v602 = vunpack.c.l.b16 %v522
        %v603 = vunpack.c.l.b16 %v523
        %v604 = vunpack.c.l.b16 %v524
        %v605 = vunpack.c.l.b16 %v525
        %v606 = vunpack.c.l.b16 %v526
        %v607 = vunpack.c.l.b16 %v527
        %v608 = vunpack.c.l.b16 %v528
        %v609 = vunpack.c.l.b16 %v529
        %v610 = vunpack.c.l.b16 %v530
        %v611 = vunpack.c.l.b16 %v531
        %v612 = vunpack.c.l.b16 %v532
        %v613 = vunpack.c.l.b16 %v533
        %v614 = vunpack.c.l.b16 %v534
        %v615 = vpack.c.b16 %v600, %v599
        %v616 = vpack.c.b16 %v602, %v601
        %v617 = vpack.c.b16 %v604, %v603
        %v618 = vpack.c.b16 %v606, %v605
        %v619 = vpack.c.b16 %v608, %v607
        %v620 = vpack.c.b16 %v610, %v609
        %v621 = vpack.c.b16 %v612, %v611
        %v622 = vpack.c.b16 %v614, %v613
        %631 = vmatpush.bf16.msra.mxu0 %v622
        %632 = vmatpush.bf16.msra.mxu0 %v621
        %633 = vmatpush.bf16.msra.mxu0 %v620
        %634 = vmatpush.bf16.msra.mxu0 %v619
        %635 = vmatpush.bf16.msra.mxu0 %v618
        %636 = vmatpush.bf16.msra.mxu0 %v617
        %637 = vmatpush.bf16.msra.mxu0 %v616
        %638 = vmatpush.bf16.msra.mxu0 %v615
        %639 = vmatmul.bf16.gmra.mxu0 %v567
        %v640 = vpop.f32.mrf.mxu0
        %v641 = vadd.f32 0.0, %v640
        %v642 = vpop.f32.mrf.mxu0
        %v643 = vadd.f32 0.0, %v642
        %644 = vmatmul.bf16.gmra.mxu0 %v568
        %v645 = vpop.f32.mrf.mxu0
        %v646 = vadd.f32 0.0, %v645
        %v647 = vpop.f32.mrf.mxu0
        %v648 = vadd.f32 0.0, %v647
        %649 = vmatmul.bf16.gmra.mxu0 %v569
        %v650 = vpop.f32.mrf.mxu0
        %v651 = vadd.f32 0.0, %v650
        %v652 = vpop.f32.mrf.mxu0
        %v653 = vadd.f32 0.0, %v652
        %654 = vmatmul.bf16.gmra.mxu0 %v570
        %v655 = vpop.f32.mrf.mxu0
        %v656 = vadd.f32 0.0, %v655
        %v657 = vpop.f32.mrf.mxu0
        %v658 = vadd.f32 0.0, %v657
        %659 = vmatmul.bf16.gmra.mxu0 %v571
        %v660 = vpop.f32.mrf.mxu0
        %v661 = vadd.f32 0.0, %v660
        %v662 = vpop.f32.mrf.mxu0
        %v663 = vadd.f32 0.0, %v662
        %664 = vmatmul.bf16.gmra.mxu0 %v572
        %v665 = vpop.f32.mrf.mxu0
        %v666 = vadd.f32 0.0, %v665
        %v667 = vpop.f32.mrf.mxu0
        %v668 = vadd.f32 0.0, %v667
        %669 = vmatmul.bf16.gmra.mxu0 %v573
        %v670 = vpop.f32.mrf.mxu0
        %v671 = vadd.f32 0.0, %v670
        %v672 = vpop.f32.mrf.mxu0
        %v673 = vadd.f32 0.0, %v672
        %674 = vmatmul.bf16.gmra.mxu0 %v574
        %v675 = vpop.f32.mrf.mxu0
        %v676 = vadd.f32 0.0, %v675
        %v677 = vpop.f32.mrf.mxu0
        %v678 = vadd.f32 0.0, %v677
        %679 = vdwg.mxu0
        %v680 = vadd.f32 %v487, %v641
        %v681 = vadd.f32 %v488, %v643
        %v682 = vadd.f32 %v489, %v646
        %v683 = vadd.f32 %v490, %v648
        %v684 = vadd.f32 %v491, %v651
        %v685 = vadd.f32 %v492, %v653
        %v686 = vadd.f32 %v493, %v656
        %v687 = vadd.f32 %v494, %v658
        %v688 = vadd.f32 %v495, %v661
        %v689 = vadd.f32 %v496, %v663
        %v690 = vadd.f32 %v497, %v666
        %v691 = vadd.f32 %v498, %v668
        %v692 = vadd.f32 %v499, %v671
        %v693 = vadd.f32 %v500, %v673
        %v694 = vadd.f32 %v501, %v676
        %v695 = vadd.f32 %v502, %v678
        %696 = vst [vmem:[#allocation2] sm:$0xff] %v680
        %697 = vst [vmem:[#allocation2 + $0x8] sm:$0xff] %v681
        %698 = vst [vmem:[#allocation2 + $0x10] sm:$0xff] %v682
        %699 = vst [vmem:[#allocation2 + $0x18] sm:$0xff] %v683
        %700 = vst [vmem:[#allocation2 + $0x20] sm:$0xff] %v684
        %701 = vst [vmem:[#allocation2 + $0x28] sm:$0xff] %v685
        %702 = vst [vmem:[#allocation2 + $0x30] sm:$0xff] %v686
        %703 = vst [vmem:[#allocation2 + $0x38] sm:$0xff] %v687
        %704 = vst [vmem:[#allocation2 + $0x40] sm:$0xff] %v688
        %705 = vst [vmem:[#allocation2 + $0x48] sm:$0xff] %v689
        %706 = vst [vmem:[#allocation2 + $0x50] sm:$0xff] %v690
        %707 = vst [vmem:[#allocation2 + $0x58] sm:$0xff] %v691
        %708 = vst [vmem:[#allocation2 + $0x60] sm:$0xff] %v692
        %709 = vst [vmem:[#allocation2 + $0x68] sm:$0xff] %v693
        %710 = vst [vmem:[#allocation2 + $0x70] sm:$0xff] %v694
        %711 = vst [vmem:[#allocation2 + $0x78] sm:$0xff] %v695
        %p712 = scmp.eq.s32.totalorder %s23, 1
        // Predicated region
        $region94: #{gnn_forward.2} parent=84 // pred_check
          %p713 = pneg %p712
        $region95: #{gnn_forward.2} parent=84 // pred_check_branch
          %715 = sbr.rel (%p713) target = $region97
        $region96: #{gnn_forward.2} parent=84 // pred_region
          %v716 = vld [vmem:[#allocation2] sm:$0xff]
          %v717 = vld [vmem:[#allocation2 + $0x8] sm:$0xff]
          %v718 = vld [vmem:[#allocation2 + $0x10] sm:$0xff]
          %v719 = vld [vmem:[#allocation2 + $0x18] sm:$0xff]
          %v720 = vld [vmem:[#allocation2 + $0x20] sm:$0xff]
          %v721 = vld [vmem:[#allocation2 + $0x28] sm:$0xff]
          %v722 = vld [vmem:[#allocation2 + $0x30] sm:$0xff]
          %v723 = vld [vmem:[#allocation2 + $0x38] sm:$0xff]
          %v724 = vld [vmem:[#allocation2 + $0x40] sm:$0xff]
          %v725 = vld [vmem:[#allocation2 + $0x48] sm:$0xff]
          %v726 = vld [vmem:[#allocation2 + $0x50] sm:$0xff]
          %v727 = vld [vmem:[#allocation2 + $0x58] sm:$0xff]
          %v728 = vld [vmem:[#allocation2 + $0x60] sm:$0xff]
          %v729 = vld [vmem:[#allocation2 + $0x68] sm:$0xff]
          %v730 = vld [vmem:[#allocation2 + $0x70] sm:$0xff]
          %v731 = vld [vmem:[#allocation2 + $0x78] sm:$0xff]
          %v732 = vld [vmem:[%s447] sm:$0xff]
          %v733 = vld [vmem:[%s447 + $0x8] sm:$0xff]
          %v734 = vld [vmem:[%s447 + $0x10] sm:$0xff]
          %v735 = vld [vmem:[%s447 + $0x18] sm:$0xff]
          %v736 = vld [vmem:[%s447 + $0x20] sm:$0xff]
          %v737 = vld [vmem:[%s447 + $0x28] sm:$0xff]
          %v738 = vld [vmem:[%s447 + $0x30] sm:$0xff]
          %v739 = vld [vmem:[%s447 + $0x38] sm:$0xff]
          %v740 = vld [vmem:[%s447 + $0x40] sm:$0xff]
          %v741 = vld [vmem:[%s447 + $0x48] sm:$0xff]
          %v742 = vld [vmem:[%s447 + $0x50] sm:$0xff]
          %v743 = vld [vmem:[%s447 + $0x58] sm:$0xff]
          %v744 = vld [vmem:[%s447 + $0x60] sm:$0xff]
          %v745 = vld [vmem:[%s447 + $0x68] sm:$0xff]
          %v746 = vld [vmem:[%s447 + $0x70] sm:$0xff]
          %v747 = vld [vmem:[%s447 + $0x78] sm:$0xff]
          %749 = vset.pattern.permute.xlu0 0
          %750 = vperm.xlu0 %749, %v732
          %v751 = vpop.permute.xlu0 %750
          %754 = vset.pattern.permute.xlu0 0
          %755 = vperm.xlu0 %754, %v733
          %v756 = vpop.permute.xlu0 %755
          %759 = vset.pattern.permute.xlu0 0
          %760 = vperm.xlu0 %759, %v734
          %v761 = vpop.permute.xlu0 %760
          %764 = vset.pattern.permute.xlu0 0
          %765 = vperm.xlu0 %764, %v735
          %v766 = vpop.permute.xlu0 %765
          %769 = vset.pattern.permute.xlu0 0
          %770 = vperm.xlu0 %769, %v736
          %v771 = vpop.permute.xlu0 %770
          %774 = vset.pattern.permute.xlu0 0
          %775 = vperm.xlu0 %774, %v737
          %v776 = vpop.permute.xlu0 %775
          %779 = vset.pattern.permute.xlu0 0
          %780 = vperm.xlu0 %779, %v738
          %v781 = vpop.permute.xlu0 %780
          %784 = vset.pattern.permute.xlu0 0
          %785 = vperm.xlu0 %784, %v739
          %v786 = vpop.permute.xlu0 %785
          %789 = vset.pattern.permute.xlu0 0
          %790 = vperm.xlu0 %789, %v740
          %v791 = vpop.permute.xlu0 %790
          %794 = vset.pattern.permute.xlu0 0
          %795 = vperm.xlu0 %794, %v741
          %v796 = vpop.permute.xlu0 %795
          %799 = vset.pattern.permute.xlu0 0
          %800 = vperm.xlu0 %799, %v742
          %v801 = vpop.permute.xlu0 %800
          %804 = vset.pattern.permute.xlu0 0
          %805 = vperm.xlu0 %804, %v743
          %v806 = vpop.permute.xlu0 %805
          %809 = vset.pattern.permute.xlu0 0
          %810 = vperm.xlu0 %809, %v744
          %v811 = vpop.permute.xlu0 %810
          %814 = vset.pattern.permute.xlu0 0
          %815 = vperm.xlu0 %814, %v745
          %v816 = vpop.permute.xlu0 %815
          %819 = vset.pattern.permute.xlu0 0
          %820 = vperm.xlu0 %819, %v746
          %v821 = vpop.permute.xlu0 %820
          %824 = vset.pattern.permute.xlu0 0
          %825 = vperm.xlu0 %824, %v747
          %v826 = vpop.permute.xlu0 %825
          %v828 = vmul.f32 %v716, %v751
          %v829 = vmul.f32 %v717, %v756
          %v830 = vmul.f32 %v718, %v761
          %v831 = vmul.f32 %v719, %v766
          %v832 = vmul.f32 %v720, %v771
          %v833 = vmul.f32 %v721, %v776
          %v834 = vmul.f32 %v722, %v781
          %v835 = vmul.f32 %v723, %v786
          %v836 = vmul.f32 %v724, %v791
          %v837 = vmul.f32 %v725, %v796
          %v838 = vmul.f32 %v726, %v801
          %v839 = vmul.f32 %v727, %v806
          %v840 = vmul.f32 %v728, %v811
          %v841 = vmul.f32 %v729, %v816
          %v842 = vmul.f32 %v730, %v821
          %v843 = vmul.f32 %v731, %v826
          %v844 = vld [vmem:[%s459] sm:$0xf]
          %v845 = vld [vmem:[%s459 + $0x4] sm:$0xf]
          %v846 = vld [vmem:[%s459 + $0x8] sm:$0xf]
          %v847 = vld [vmem:[%s459 + $0xc] sm:$0xf]
          %v848 = vld [vmem:[%s459 + $0x10] sm:$0xf]
          %v849 = vld [vmem:[%s459 + $0x14] sm:$0xf]
          %v850 = vld [vmem:[%s459 + $0x18] sm:$0xf]
          %v851 = vld [vmem:[%s459 + $0x1c] sm:$0xf]
          %v852 = vld [vmem:[%s459 + $0x20] sm:$0xf]
          %v853 = vld [vmem:[%s459 + $0x24] sm:$0xf]
          %v854 = vld [vmem:[%s459 + $0x28] sm:$0xf]
          %v855 = vld [vmem:[%s459 + $0x2c] sm:$0xf]
          %v856 = vld [vmem:[%s459 + $0x30] sm:$0xf]
          %v857 = vld [vmem:[%s459 + $0x34] sm:$0xf]
          %v858 = vld [vmem:[%s459 + $0x38] sm:$0xf]
          %v859 = vld [vmem:[%s459 + $0x3c] sm:$0xf]
          %v860 = vunpack.c.l.bf16 %v844
          %v861 = vunpack.c.l.bf16 %v845
          %v862 = vunpack.c.l.bf16 %v846
          %v863 = vunpack.c.l.bf16 %v847
          %v864 = vunpack.c.l.bf16 %v848
          %v865 = vunpack.c.l.bf16 %v849
          %v866 = vunpack.c.l.bf16 %v850
          %v867 = vunpack.c.l.bf16 %v851
          %v868 = vunpack.c.l.bf16 %v852
          %v869 = vunpack.c.l.bf16 %v853
          %v870 = vunpack.c.l.bf16 %v854
          %v871 = vunpack.c.l.bf16 %v855
          %v872 = vunpack.c.l.bf16 %v856
          %v873 = vunpack.c.l.bf16 %v857
          %v874 = vunpack.c.l.bf16 %v858
          %v875 = vunpack.c.l.bf16 %v859
          %v876 = vld [vmem:[%s4] sm:$0xff]
          %v877 = vld [vmem:[%s4 + $0x8] sm:$0xff]
          %v878 = vld [vmem:[%s4 + $0x10] sm:$0xff]
          %v879 = vld [vmem:[%s4 + $0x18] sm:$0xff]
          %v880 = vld [vmem:[%s4 + $0x20] sm:$0xff]
          %v881 = vld [vmem:[%s4 + $0x28] sm:$0xff]
          %v882 = vld [vmem:[%s4 + $0x30] sm:$0xff]
          %v883 = vld [vmem:[%s4 + $0x38] sm:$0xff]
          %v884 = vld [vmem:[%s4 + $0x40] sm:$0xff]
          %v885 = vld [vmem:[%s4 + $0x48] sm:$0xff]
          %v886 = vld [vmem:[%s4 + $0x50] sm:$0xff]
          %v887 = vld [vmem:[%s4 + $0x58] sm:$0xff]
          %v888 = vld [vmem:[%s4 + $0x60] sm:$0xff]
          %v889 = vld [vmem:[%s4 + $0x68] sm:$0xff]
          %v890 = vld [vmem:[%s4 + $0x70] sm:$0xff]
          %v891 = vld [vmem:[%s4 + $0x78] sm:$0xff]
          %v892 = vld [vmem:[%s5] sm:$0xff]
          %v893 = vld [vmem:[%s5 + $0x8] sm:$0xff]
          %v894 = vld [vmem:[%s5 + $0x10] sm:$0xff]
          %v895 = vld [vmem:[%s5 + $0x18] sm:$0xff]
          %v896 = vld [vmem:[%s5 + $0x20] sm:$0xff]
          %v897 = vld [vmem:[%s5 + $0x28] sm:$0xff]
          %v898 = vld [vmem:[%s5 + $0x30] sm:$0xff]
          %v899 = vld [vmem:[%s5 + $0x38] sm:$0xff]
          %v900 = vld [vmem:[%s5 + $0x40] sm:$0xff]
          %v901 = vld [vmem:[%s5 + $0x48] sm:$0xff]
          %v902 = vld [vmem:[%s5 + $0x50] sm:$0xff]
          %v903 = vld [vmem:[%s5 + $0x58] sm:$0xff]
          %v904 = vld [vmem:[%s5 + $0x60] sm:$0xff]
          %v905 = vld [vmem:[%s5 + $0x68] sm:$0xff]
          %v906 = vld [vmem:[%s5 + $0x70] sm:$0xff]
          %v907 = vld [vmem:[%s5 + $0x78] sm:$0xff]
          %908 = vmatpush.msra.mxu0 %v907
          %909 = vmatpush.msra.mxu0 %v906
          %910 = vmatpush.msra.mxu0 %v905
          %911 = vmatpush.msra.mxu0 %v904
          %912 = vmatpush.msra.mxu0 %v903
          %913 = vmatpush.msra.mxu0 %v902
          %914 = vmatpush.msra.mxu0 %v901
          %915 = vmatpush.msra.mxu0 %v900
          %916 = vmatpush.msra.mxu0 %v899
          %917 = vmatpush.msra.mxu0 %v898
          %918 = vmatpush.msra.mxu0 %v897
          %919 = vmatpush.msra.mxu0 %v896
          %920 = vmatpush.msra.mxu0 %v895
          %921 = vmatpush.msra.mxu0 %v894
          %922 = vmatpush.msra.mxu0 %v893
          %923 = vmatpush.msra.mxu0 %v892
          %924 = vmatmul.f32.gmra.mxu0 %v860
          %v925 = vpop.f32.mrf.mxu0
          %v926 = vadd.f32 0.0, %v925
          %927 = vmatmul.f32.gmra.mxu0 %v861
          %v928 = vpop.f32.mrf.mxu0
          %v929 = vadd.f32 0.0, %v928
          %930 = vmatmul.f32.gmra.mxu0 %v862
          %v931 = vpop.f32.mrf.mxu0
          %v932 = vadd.f32 0.0, %v931
          %933 = vmatmul.f32.gmra.mxu0 %v863
          %v934 = vpop.f32.mrf.mxu0
          %v935 = vadd.f32 0.0, %v934
          %936 = vmatmul.f32.gmra.mxu0 %v864
          %v937 = vpop.f32.mrf.mxu0
          %v938 = vadd.f32 0.0, %v937
          %939 = vmatmul.f32.gmra.mxu0 %v865
          %v940 = vpop.f32.mrf.mxu0
          %v941 = vadd.f32 0.0, %v940
          %942 = vmatmul.f32.gmra.mxu0 %v866
          %v943 = vpop.f32.mrf.mxu0
          %v944 = vadd.f32 0.0, %v943
          %945 = vmatmul.f32.gmra.mxu0 %v867
          %v946 = vpop.f32.mrf.mxu0
          %v947 = vadd.f32 0.0, %v946
          %948 = vmatmul.f32.gmra.mxu0 %v868
          %v949 = vpop.f32.mrf.mxu0
          %v950 = vadd.f32 0.0, %v949
          %951 = vmatmul.f32.gmra.mxu0 %v869
          %v952 = vpop.f32.mrf.mxu0
          %v953 = vadd.f32 0.0, %v952
          %954 = vmatmul.f32.gmra.mxu0 %v870
          %v955 = vpop.f32.mrf.mxu0
          %v956 = vadd.f32 0.0, %v955
          %957 = vmatmul.f32.gmra.mxu0 %v871
          %v958 = vpop.f32.mrf.mxu0
          %v959 = vadd.f32 0.0, %v958
          %960 = vmatmul.f32.gmra.mxu0 %v872
          %v961 = vpop.f32.mrf.mxu0
          %v962 = vadd.f32 0.0, %v961
          %963 = vmatmul.f32.gmra.mxu0 %v873
          %v964 = vpop.f32.mrf.mxu0
          %v965 = vadd.f32 0.0, %v964
          %966 = vmatmul.f32.gmra.mxu0 %v874
          %v967 = vpop.f32.mrf.mxu0
          %v968 = vadd.f32 0.0, %v967
          %969 = vmatmul.f32.gmra.mxu0 %v875
          %v970 = vpop.f32.mrf.mxu0
          %v971 = vadd.f32 0.0, %v970
          %972 = vdwg.mxu0
          %973 = vmatpush.msra.mxu0 %v891
          %974 = vmatpush.msra.mxu0 %v890
          %975 = vmatpush.msra.mxu0 %v889
          %976 = vmatpush.msra.mxu0 %v888
          %977 = vmatpush.msra.mxu0 %v887
          %978 = vmatpush.msra.mxu0 %v886
          %979 = vmatpush.msra.mxu0 %v885
          %980 = vmatpush.msra.mxu0 %v884
          %981 = vmatpush.msra.mxu0 %v883
          %982 = vmatpush.msra.mxu0 %v882
          %983 = vmatpush.msra.mxu0 %v881
          %984 = vmatpush.msra.mxu0 %v880
          %985 = vmatpush.msra.mxu0 %v879
          %986 = vmatpush.msra.mxu0 %v878
          %987 = vmatpush.msra.mxu0 %v877
          %988 = vmatpush.msra.mxu0 %v876
          %989 = vmatmul.f32.gmra.mxu0 %v828
          %v990 = vpop.f32.mrf.mxu0
          %v991 = vadd.f32 %v926, %v990
          %992 = vmatmul.f32.gmra.mxu0 %v829
          %v993 = vpop.f32.mrf.mxu0
          %v994 = vadd.f32 %v929, %v993
          %995 = vmatmul.f32.gmra.mxu0 %v830
          %v996 = vpop.f32.mrf.mxu0
          %v997 = vadd.f32 %v932, %v996
          %998 = vmatmul.f32.gmra.mxu0 %v831
          %v999 = vpop.f32.mrf.mxu0
          %v1000 = vadd.f32 %v935, %v999
          %1001 = vmatmul.f32.gmra.mxu0 %v832
          %v1002 = vpop.f32.mrf.mxu0
          %v1003 = vadd.f32 %v938, %v1002
          %1004 = vmatmul.f32.gmra.mxu0 %v833
          %v1005 = vpop.f32.mrf.mxu0
          %v1006 = vadd.f32 %v941, %v1005
          %1007 = vmatmul.f32.gmra.mxu0 %v834
          %v1008 = vpop.f32.mrf.mxu0
          %v1009 = vadd.f32 %v944, %v1008
          %1010 = vmatmul.f32.gmra.mxu0 %v835
          %v1011 = vpop.f32.mrf.mxu0
          %v1012 = vadd.f32 %v947, %v1011
          %1013 = vmatmul.f32.gmra.mxu0 %v836
          %v1014 = vpop.f32.mrf.mxu0
          %v1015 = vadd.f32 %v950, %v1014
          %1016 = vmatmul.f32.gmra.mxu0 %v837
          %v1017 = vpop.f32.mrf.mxu0
          %v1018 = vadd.f32 %v953, %v1017
          %1019 = vmatmul.f32.gmra.mxu0 %v838
          %v1020 = vpop.f32.mrf.mxu0
          %v1021 = vadd.f32 %v956, %v1020
          %1022 = vmatmul.f32.gmra.mxu0 %v839
          %v1023 = vpop.f32.mrf.mxu0
          %v1024 = vadd.f32 %v959, %v1023
          %1025 = vmatmul.f32.gmra.mxu0 %v840
          %v1026 = vpop.f32.mrf.mxu0
          %v1027 = vadd.f32 %v962, %v1026
          %1028 = vmatmul.f32.gmra.mxu0 %v841
          %v1029 = vpop.f32.mrf.mxu0
          %v1030 = vadd.f32 %v965, %v1029
          %1031 = vmatmul.f32.gmra.mxu0 %v842
          %v1032 = vpop.f32.mrf.mxu0
          %v1033 = vadd.f32 %v968, %v1032
          %1034 = vmatmul.f32.gmra.mxu0 %v843
          %v1035 = vpop.f32.mrf.mxu0
          %v1036 = vadd.f32 %v971, %v1035
          %1037 = vdwg.mxu0
          %v1038 = vld [vmem:[%s6] sm:$0x1]
          %v1040 = vperm.slane %v1038, 0
          %v1042 = vadd.f32 %v991, %v1040
          %v1043 = vadd.f32 %v994, %v1040
          %v1044 = vadd.f32 %v997, %v1040
          %v1045 = vadd.f32 %v1000, %v1040
          %v1046 = vadd.f32 %v1003, %v1040
          %v1047 = vadd.f32 %v1006, %v1040
          %v1048 = vadd.f32 %v1009, %v1040
          %v1049 = vadd.f32 %v1012, %v1040
          %v1050 = vadd.f32 %v1015, %v1040
          %v1051 = vadd.f32 %v1018, %v1040
          %v1052 = vadd.f32 %v1021, %v1040
          %v1053 = vadd.f32 %v1024, %v1040
          %v1054 = vadd.f32 %v1027, %v1040
          %v1055 = vadd.f32 %v1030, %v1040
          %v1056 = vadd.f32 %v1033, %v1040
          %v1057 = vadd.f32 %v1036, %v1040
          %v1058 = vmax.f32 %v1042, 0.0
          %v1059 = vmax.f32 %v1043, 0.0
          %v1060 = vmax.f32 %v1044, 0.0
          %v1061 = vmax.f32 %v1045, 0.0
          %v1062 = vmax.f32 %v1046, 0.0
          %v1063 = vmax.f32 %v1047, 0.0
          %v1064 = vmax.f32 %v1048, 0.0
          %v1065 = vmax.f32 %v1049, 0.0
          %v1066 = vmax.f32 %v1050, 0.0
          %v1067 = vmax.f32 %v1051, 0.0
          %v1068 = vmax.f32 %v1052, 0.0
          %v1069 = vmax.f32 %v1053, 0.0
          %v1070 = vmax.f32 %v1054, 0.0
          %v1071 = vmax.f32 %v1055, 0.0
          %v1072 = vmax.f32 %v1056, 0.0
          %v1073 = vmax.f32 %v1057, 0.0
          %v1074 = vpack.c.bf16 %v1058, %v1058
          %v1075 = vpack.c.bf16 %v1059, %v1059
          %v1076 = vpack.c.bf16 %v1060, %v1060
          %v1077 = vpack.c.bf16 %v1061, %v1061
          %v1078 = vpack.c.bf16 %v1062, %v1062
          %v1079 = vpack.c.bf16 %v1063, %v1063
          %v1080 = vpack.c.bf16 %v1064, %v1064
          %v1081 = vpack.c.bf16 %v1065, %v1065
          %v1082 = vpack.c.bf16 %v1066, %v1066
          %v1083 = vpack.c.bf16 %v1067, %v1067
          %v1084 = vpack.c.bf16 %v1068, %v1068
          %v1085 = vpack.c.bf16 %v1069, %v1069
          %v1086 = vpack.c.bf16 %v1070, %v1070
          %v1087 = vpack.c.bf16 %v1071, %v1071
          %v1088 = vpack.c.bf16 %v1072, %v1072
          %v1089 = vpack.c.bf16 %v1073, %v1073
          %1090 = vst [vmem:[%s465] sm:$0xf] %v1074
          %1091 = vst [vmem:[%s465 + $0x4] sm:$0xf] %v1075
          %1092 = vst [vmem:[%s465 + $0x8] sm:$0xf] %v1076
          %1093 = vst [vmem:[%s465 + $0xc] sm:$0xf] %v1077
          %1094 = vst [vmem:[%s465 + $0x10] sm:$0xf] %v1078
          %1095 = vst [vmem:[%s465 + $0x14] sm:$0xf] %v1079
          %1096 = vst [vmem:[%s465 + $0x18] sm:$0xf] %v1080
          %1097 = vst [vmem:[%s465 + $0x1c] sm:$0xf] %v1081
          %1098 = vst [vmem:[%s465 + $0x20] sm:$0xf] %v1082
          %1099 = vst [vmem:[%s465 + $0x24] sm:$0xf] %v1083
          %1100 = vst [vmem:[%s465 + $0x28] sm:$0xf] %v1084
          %1101 = vst [vmem:[%s465 + $0x2c] sm:$0xf] %v1085
          %1102 = vst [vmem:[%s465 + $0x30] sm:$0xf] %v1086
          %1103 = vst [vmem:[%s465 + $0x34] sm:$0xf] %v1087
          %1104 = vst [vmem:[%s465 + $0x38] sm:$0xf] %v1088
          %1105 = vst [vmem:[%s465 + $0x3c] sm:$0xf] %v1089
        $region97: #{gnn_forward.2} parent=84 // pred_fallthru
          _
        %s1106 = smul.u32 16, %s22
        %p1107 = scmp.lt.s32.totalorder %s1106, 31
        %s1108 = scalar_select %p1107, %s1106, 31
        %s1109 = smul.addr %s1108, 4
        %s1110 = scalar_lea.vmem %s7, %s1109
        // Predicated region
        $region98: #{gnn_forward.2} parent=84 // pred_check
          %p1111 = pneg %p217
        $region99: #{gnn_forward.2} parent=84 // pred_check_branch
          %1113 = sbr.rel (%p1111) target = $region101
        $region100: #{gnn_forward.2} parent=84 // pred_region
          %s1114 = smul.u32 16, %s22
        $region101: #{gnn_forward.2} parent=84 // pred_fallthru
          _
      $region85: #{gnn_forward.2} parent=5 // pred_fallthru
        _
      %p1115 = scmp.le.s32.totalorder 2, %s13
      // Predicated region
      $region102: #{gnn_forward.2} parent=5 // pred_check
        %p1116 = pneg %p1115
      $region103: #{gnn_forward.2} parent=5 // pred_check_branch
        %1118 = sbr.rel (%p1116) target = $region105
      $region104: #{gnn_forward.2} parent=5 // pred_region
        %s1119 = ssub.s32 %s13, 2
        // Predicated region
        $region106: #{gnn_forward.2} parent=104 // pred_check
          %p1120 = pneg %p223
        $region107: #{gnn_forward.2} parent=104 // pred_check_branch
          %1122 = sbr.rel (%p1120) target = $region109
        $region108: #{gnn_forward.2} parent=104 // pred_region
          %s1123 = smul.u32 16, %s24
          %p1124 = scmp.lt.s32.totalorder %s1123, 31
          %s1125 = scalar_select %p1124, %s1123, 31
          %s1126 = smul.addr %s1125, 4
          %s1127 = scalar_lea.vmem %s7, %s1126
        $region109: #{gnn_forward.2} parent=104 // pred_fallthru
          _
      $region105: #{gnn_forward.2} parent=5 // pred_fallthru
        _
    $region6: #{gnn_forward.2} parent=1 // loop_footer
      %s17 = sadd.s32 1, %s13
    $region7: #{gnn_forward.2} parent=1 // loop_footer_branch
      %12 = sbr.rel target = $region3
    $region8: #{gnn_forward.2} parent=1 // loop_exit
      _

</llo_original>
